<compile_context>
chip_gen: v6e
topology: v6e:2x2x1
jax: 0.10.0
libtpu: 0.0.40
codegen_flags: <defaults>
</compile_context>

<pallas_src>
import functools

import jax
import jax.numpy as jnp
from jax.experimental import pallas as pl
from jax.experimental.pallas import tpu as pltpu

_BN_EPS = 1e-5
_MAX_TILE_M = 1024      # rows per grid step (multiple of 16 for bf16 packing)


def _round_up(v, m):
    return ((v + m - 1) // m) * m


# --------------------------------------------------------------------------- #
# in-kernel helpers
# --------------------------------------------------------------------------- #
def _row_mask(tile_m, n_valid):
    """(tile_m, 1) f32 mask: 1.0 for global rows < n_valid, else 0.0."""
    row0 = pl.program_id(0) * tile_m
    gid = row0 + jax.lax.broadcasted_iota(jnp.int32, (tile_m, 1), 0)
    return (gid < n_valid).astype(jnp.float32)


def _emit_stats(st_ref, h):
    """Write per-tile [sum ; sum_sq] of h (rows already masked). st: (1,2,C)."""
    s = jnp.sum(h, axis=0, keepdims=True)
    sq = jnp.sum(h * h, axis=0, keepdims=True)
    st_ref[0, :, :] = jnp.concatenate([s, sq], axis=0)


# --------------------------------------------------------------------------- #
# kernels
# --------------------------------------------------------------------------- #
def _layer12_kernel(x_ref, w1_ref, b1_ref, w2_ref, b2_ref, o_ref, st_ref, *,
                    n_valid):
    """z = ReLU(x @ W1'' + b1'')  (BN0+BN1 folded, K=3 unrolled VPU FMAs)
       h = z @ W2 + b2            (bf16 MXU, f32 accumulation)
       emits per-tile (sum, sum_sq) of h for BN2."""
    tile_m, fdim = x_ref.shape
    x = x_ref[...]                                  # f32
    z = b1_ref[...]                                 # (1, 64) broadcasts up
    for c in range(fdim):                           # static unroll, K == fea_dim
        z = z + x[:, c:c + 1] * w1_ref[c:c + 1, :]
    z = jnp.maximum(z, 0.0)
    h = jnp.dot(z.astype(jnp.bfloat16), w2_ref[...],
                preferred_element_type=jnp.float32) + b2_ref[...]
    h = h * _row_mask(tile_m, n_valid)              # zero padded rows once
    _emit_stats(st_ref, h)
    o_ref[...] = h.astype(o_ref.dtype)              # bf16 store


def _mid_layer_kernel(sc_ref, sh_ref, w_ref, b_ref, x_ref, o_ref, st_ref, *,
                      n_valid):
    """h = ReLU(x*scale + shift) @ W + b   (folded BN + ReLU, bf16 MXU)."""
    tile_m = x_ref.shape[0]
    x = x_ref[...].astype(jnp.float32)
    z = jnp.maximum(x * sc_ref[...] + sh_ref[...], 0.0)
    h = jnp.dot(z.astype(jnp.bfloat16), w_ref[...],
                preferred_element_type=jnp.float32) + b_ref[...]
    h = h * _row_mask(tile_m, n_valid)
    _emit_stats(st_ref, h)
    o_ref[...] = h.astype(o_ref.dtype)


def _last_layer_kernel(has_compre, sc_ref, sh_ref, w_ref, b_ref, *refs):
    """Final BN3 + ReLU + Linear4 (+ fea_compression Linear+ReLU)."""
    if has_compre:
        wc_ref, bc_ref, x_ref, o_ref = refs
    else:
        x_ref, o_ref = refs
    x = x_ref[...].astype(jnp.float32)
    z = jnp.maximum(x * sc_ref[...] + sh_ref[...], 0.0)
    h = jnp.dot(z.astype(jnp.bfloat16), w_ref[...],
                preferred_element_type=jnp.float32) + b_ref[...]
    if has_compre:
        h = jnp.maximum(jnp.dot(h.astype(jnp.bfloat16), wc_ref[...],
                                preferred_element_type=jnp.float32) + bc_ref[...],
                        0.0)
    o_ref[...] = h.astype(o_ref.dtype)   # padded rows sliced off outside


# --------------------------------------------------------------------------- #
# JAX glue (per-channel scale/shift folds: O(C) work, fused by jit)
# --------------------------------------------------------------------------- #
def _bn_scale_shift(s, sq, n, gamma, beta):
    # NOTE: E[x^2]-E[x]^2 in f32 can lose precision for very large n with
    # large-mean activations; fine at these point counts (matches reference).
    inv_n = 1.0 / float(max(int(n), 1))             # n is static under jit
    mean = s * inv_n
    var = jnp.maximum(sq * inv_n - mean * mean, 0.0)
    scale = gamma * jax.lax.rsqrt(var + _BN_EPS)
    shift = beta - mean * scale
    return scale, shift


def _reduce_stats(st):
    tot = jnp.sum(st, axis=0)                       # (2, C)
    return tot[0:1, :], tot[1:2, :]


def _ppmodel_forward(params, x, *, fea_dim, dims, fea_compre, pt_fea_dim):
    """Jitted PPmodel (+ fea_compression) forward over (n, fea_dim) points."""
    p = params
    n = int(x.shape[0])
    x = x.astype(jnp.float32)

    # row tiling (sublane / bf16-pack aligned)
    tile_m = _MAX_TILE_M
    n_pad = _round_up(max(n, 1), 16)
    if n_pad <= tile_m:
        tile_m = n_pad
    else:
        n_pad = _round_up(n_pad, tile_m)
    grid_m = n_pad // tile_m

    x_pad = jnp.zeros((n_pad, fea_dim), jnp.float32).at[:n].set(x)

    cparams = pltpu.CompilerParams(
        dimension_semantics=("parallel",),           # row tiles are independent
        vmem_limit_bytes=32 * 1024 * 1024)
    # TODO(synk): on v7x verify via xprof that the row axis shards over both
    # TensorCores; switch to pltpu.CORE_PARALLEL if one TC sits idle.

    def row_spec(c):
        return pl.BlockSpec((tile_m, c), lambda i: (i, 0))

    def const_spec(arr):
        return pl.BlockSpec(arr.shape, lambda i: (0,) * arr.ndim)

    def stat_spec(c):
        return pl.BlockSpec((1, 2, c), lambda i: (i, 0, 0))

    def stat_shape(c):
        return jax.ShapeDtypeStruct((grid_m, 2, c), jnp.float32)

    def grid_spec(in_specs, out_specs):
        return pltpu.PrefetchScalarGridSpec(
            num_scalar_prefetch=0, grid=(grid_m,),
            in_specs=in_specs, out_specs=out_specs)

    # ---- BN0 stats of the raw (n, 3) input: plain JAX, no kernel ------------
    s0 = jnp.sum(x, axis=0, keepdims=True)
    sq0 = jnp.sum(x * x, axis=0, keepdims=True)
    sc0, sh0 = _bn_scale_shift(s0, sq0, n, p["bn0_g"], p["bn0_b"])
    w1p = p["w1"] * sc0.T                            # fold BN0 into Linear1
    b1p = sh0 @ p["w1"] + p["b1"]

    # ---- analytic BN1 stats (h1 = x @ w1p + b1p is affine in x) -------------
    gram = x.T @ x                                   # (fea_dim, fea_dim)
    m1 = s0 @ w1p                                    # Σ_r (x_r · w_j)
    s1 = m1 + n * b1p
    sq1 = (jnp.sum(w1p * (gram @ w1p), axis=0, keepdims=True)
           + 2.0 * b1p * m1 + n * b1p * b1p)
    sc1, sh1 = _bn_scale_shift(s1, sq1, n, p["bn1_g"], p["bn1_b"])
    w1f = w1p * sc1                                  # fold BN1 into Linear1 too
    b1f = b1p * sc1 + sh1

    # ---- stage 1: folded Linear1 + ReLU + Linear2 (h1 never hits HBM) -------
    d2 = dims[2]
    h, st = pl.pallas_call(
        functools.partial(_layer12_kernel, n_valid=n),
        out_shape=(jax.ShapeDtypeStruct((n_pad, d2), jnp.bfloat16),
                   stat_shape(d2)),
        grid_spec=grid_spec(
            [row_spec(fea_dim), const_spec(w1f), const_spec(b1f),
             const_spec(p["w2_bf"]), const_spec(p["b2"])],
            [row_spec(d2), stat_spec(d2)]),
        compiler_params=cparams,
    )(x_pad, w1f, b1f, p["w2_bf"], p["b2"])

    # ---- stage 2: BN2 + ReLU + Linear3 --------------------------------------
    d3 = dims[3]
    s2, sq2 = _reduce_stats(st)
    sc2, sh2 = _bn_scale_shift(s2, sq2, n, p["bn2_g"], p["bn2_b"])
    h, st = pl.pallas_call(
        functools.partial(_mid_layer_kernel, n_valid=n),
        out_shape=(jax.ShapeDtypeStruct((n_pad, d3), jnp.bfloat16),
                   stat_shape(d3)),
        grid_spec=grid_spec(
            [const_spec(sc2), const_spec(sh2), const_spec(p["w3_bf"]),
             const_spec(p["b3"]), row_spec(d2)],
            [row_spec(d3), stat_spec(d3)]),
        compiler_params=cparams,
    )(sc2, sh2, p["w3_bf"], p["b3"], h)

    # ---- stage 3: BN3 + ReLU + Linear4 (+ fea_compression) ------------------
    s3, sq3 = _reduce_stats(st)
    sc3, sh3 = _bn_scale_shift(s3, sq3, n, p["bn3_g"], p["bn3_b"])
    has_compre = fea_compre is not None
    if has_compre:
        extra_args = [p["wc_bf"], p["bc"]]
        extra_specs = [const_spec(p["wc_bf"]), const_spec(p["bc"])]
    else:
        extra_args, extra_specs = [], []

    out = pl.pallas_call(
        functools.partial(_last_layer_kernel, has_compre),
        out_shape=jax.ShapeDtypeStruct((n_pad, pt_fea_dim), jnp.float32),
        grid_spec=grid_spec(
            [const_spec(sc3), const_spec(sh3), const_spec(p["w4_bf"]),
             const_spec(p["b4"])] + extra_specs + [row_spec(d3)],
            row_spec(pt_fea_dim)),
        compiler_params=cparams,
    )(sc3, sh3, p["w4_bf"], p["b4"], *extra_args, h)

    return out[:n]


# --------------------------------------------------------------------------- #
class CylinderFeaPallas:
    """JAX/Pallas port of cylinder_fea (forward pass only)."""

    def __init__(self, grid_size, fea_dim=3, out_pt_fea_dim=64,
                 max_pt_per_encode=64, fea_compre=None, seed=0):
        self.grid_size = grid_size
        self.fea_dim = fea_dim
        self.max_pt = max_pt_per_encode
        self.fea_compre = fea_compre
        self.pool_dim = out_pt_fea_dim
        self.pt_fea_dim = fea_compre if fea_compre is not None else out_pt_fea_dim
        self.dims = (fea_dim, 64, 128, 256, out_pt_fea_dim)
        # NOTE: self.local_pool_op (MaxPool2d) in the original module is never
        # used in forward(), so it is not instantiated here.

        key = jax.random.PRNGKey(seed)
        p = {}
        p["bn0_g"] = jnp.ones((1, fea_dim), jnp.float32)
        p["bn0_b"] = jnp.zeros((1, fea_dim), jnp.float32)
        for i in range(4):
            key, kw, kb = jax.random.split(key, 3)
            bound = 1.0 / float(self.dims[i]) ** 0.5
            p[f"w{i+1}"] = jax.random.uniform(kw, (self.dims[i], self.dims[i + 1]),
                                              jnp.float32, -bound, bound)
            p[f"b{i+1}"] = jax.random.uniform(kb, (1, self.dims[i + 1]),
                                              jnp.float32, -bound, bound)
        for i, c in enumerate((64, 128, 256), start=1):
            p[f"bn{i}_g"] = jnp.ones((1, c), jnp.float32)
            p[f"bn{i}_b"] = jnp.zeros((1, c), jnp.float32)
        if fea_compre is not None:
            key, kw, kb = jax.random.split(key, 3)
            bound = 1.0 / float(out_pt_fea_dim) ** 0.5
            p["wc"] = jax.random.uniform(kw, (out_pt_fea_dim, fea_compre),
                                         jnp.float32, -bound, bound)
            p["bc"] = jax.random.uniform(kb, (1, fea_compre),
                                         jnp.float32, -bound, bound)
        # precompute bf16 MXU operands once (no per-call weight casting)
        for name in ("w2", "w3", "w4"):
            p[name + "_bf"] = p[name].astype(jnp.bfloat16)
        if fea_compre is not None:
            p["wc_bf"] = p["wc"].astype(jnp.bfloat16)
        self.params = p

        self._forward = jax.jit(functools.partial(
            _ppmodel_forward,
            fea_dim=self.fea_dim,
            dims=self.dims,
            fea_compre=self.fea_compre,
            pt_fea_dim=self.pt_fea_dim))

    # pure-JAX reference mirroring the kernel math (bf16 matmul operands,
    # bf16 HBM storage of h2/h3, f32 stats/accumulation, h1 kept in f32).
    def _ppmodel_ref(self, x):
        p = self.params
        n = x.shape[0]
        bf = lambda v: v.astype(jnp.bfloat16)

        def full_stats(h):
            return (jnp.sum(h, axis=0, keepdims=True),
                    jnp.sum(h * h, axis=0, keepdims=True))

        x = x.astype(jnp.float32)
        s0, sq0 = full_stats(x)
        sc0, sh0 = _bn_scale_shift(s0, sq0, n, p["bn0_g"], p["bn0_b"])
        w1p = p["w1"] * sc0.T
        b1p = sh0 @ p["w1"] + p["b1"]
        h1 = x @ w1p + b1p                              # f32, never stored
        s1, sq1 = full_stats(h1)
        sc1, sh1 = _bn_scale_shift(s1, sq1, n, p["bn1_g"], p["bn1_b"])
        z1 = jnp.maximum(h1 * sc1 + sh1, 0.0)
        h = jnp.dot(bf(z1), bf(p["w2"]),
                    preferred_element_type=jnp.float32) + p["b2"]
        for i in (2, 3):
            s, sq = full_stats(h)                       # stats from f32 output
            sc, sh = _bn_scale_shift(s, sq, n, p[f"bn{i}_g"], p[f"bn{i}_b"])
            hin = bf(h).astype(jnp.float32)             # bf16 HBM roundtrip
            z = jnp.maximum(hin * sc + sh, 0.0)
            h = jnp.dot(bf(z), bf(p[f"w{i+1}"]),
                        preferred_element_type=jnp.float32) + p[f"b{i+1}"]
        if self.fea_compre is not None:
            h = jnp.maximum(jnp.dot(bf(h), bf(p["wc"]),
                                    preferred_element_type=jnp.float32) + p["bc"],
                            0.0)
        return h

    # ------------------------------------------------------------------ #
    def __call__(self, pt_fea, xy_ind, shuffle_key):
        # F.pad(xy_ind[i], (1, 0), value=i) -> prepend batch-index column
        cat_pt_ind = []
        for i_batch, ind in enumerate(xy_ind):
            pad_col = jnp.full((ind.shape[0], 1), i_batch, dtype=ind.dtype)
            cat_pt_ind.append(jnp.concatenate([pad_col, ind], axis=1))
        cat_pt_fea = jnp.concatenate(pt_fea, axis=0)
        cat_pt_ind = jnp.concatenate(cat_pt_ind, axis=0)

        # TODO(synk): torch.randperm replaced with jax.random.permutation
        # (same semantics, different RNG stream).
        pt_num = cat_pt_fea.shape[0]
        perm = jax.random.permutation(shuffle_key, pt_num)
        cat_pt_fea = cat_pt_fea[perm, :]
        cat_pt_ind = cat_pt_ind[perm, :]

        processed = self._forward(self.params, cat_pt_fea)
        return cat_pt_ind, processed, cat_pt_fea     # cat_pt_fea for ref check


if __name__ == "__main__":
    key = jax.random.PRNGKey(0)
    k_fea, k_ind, k_perm = jax.random.split(key, 3)

    grid_size = [16, 16, 8]

    def make_scans(n_points, kf0, ki0):
        pt_fea, xy_ind = [], []
        for npts in n_points:
            kf0, kf = jax.random.split(kf0)
            ki0, ki = jax.random.split(ki0)
            pt_fea.append(jax.random.normal(kf, (npts, 3), jnp.float32))
            xy_ind.append(jax.random.randint(ki, (npts, 3), 0, 8, jnp.int32))
        return pt_fea, xy_ind

    # small case: exercise both final-layer branches (fea_compre on / off)
    pt_fea, xy_ind = make_scans([50, 45], k_fea, k_ind)
    for fea_compre in (16, None):
        model = CylinderFeaPallas(grid_size, fea_dim=3, out_pt_fea_dim=64,
                                  max_pt_per_encode=64, fea_compre=fea_compre,
                                  seed=0)
        cat_pt_ind, processed, shuffled_fea = model(pt_fea, xy_ind, k_perm)
        jax.block_until_ready((cat_pt_ind, processed))

        ref = model._ppmodel_ref(shuffled_fea)
        assert cat_pt_ind.shape == (95, 4)
        assert processed.shape == (95, model.pt_fea_dim)
        assert bool(jnp.all(jnp.isfinite(processed)))
        max_err = float(jnp.max(jnp.abs(processed - ref)))
        assert jnp.allclose(processed, ref, atol=2e-2, rtol=2e-2), max_err

    # multi-tile case: exercises grid_m > 1, row masking, parallel row axis
    pt_fea, xy_ind = make_scans([700, 500], k_fea, k_ind)
    model = CylinderFeaPallas(grid_size, fea_dim=3, out_pt_fea_dim=64,
                              max_pt_per_encode=64, fea_compre=None, seed=0)
    cat_pt_ind, processed, shuffled_fea = model(pt_fea, xy_ind, k_perm)
    jax.block_until_ready(processed)
    ref = model._ppmodel_ref(shuffled_fea)
    assert processed.shape == (1200, 64)
    assert bool(jnp.all(jnp.isfinite(processed)))
    max_err = float(jnp.max(jnp.abs(processed - ref)))
    assert jnp.allclose(processed, ref, atol=2e-2, rtol=2e-2), max_err

    print("KERNEL_OK")
</pallas_src>

<mosaic_0001>
module attributes {stable_mosaic.version = 11 : i64} {
  func.func @_layer12_kernel(%arg0: i32, %arg1: memref<96x3xf32, #tpu.memory_space<vmem>>, %arg2: memref<3x64xf32, #tpu.memory_space<vmem>>, %arg3: memref<1x64xf32, #tpu.memory_space<vmem>>, %arg4: memref<64x128xbf16, #tpu.memory_space<vmem>>, %arg5: memref<1x128xf32, #tpu.memory_space<vmem>>, %arg6: memref<96x128xbf16, #tpu.memory_space<vmem>>, %arg7: memref<1x2x128xf32, #tpu.memory_space<vmem>>) attributes {dimension_semantics = [#tpu.dimension_semantics<parallel>], iteration_bounds = array<i64: 1>, scalar_prefetch = 0 : i64, scratch_operands = 0 : i64, tpu.core_type = #tpu.core_type<tc>, window_params = [{transform_indices = @transform_0, window_bounds = array<i64: 96, 3>}, {pipeline_mode = #tpu.pipeline_mode<synchronous>, transform_indices = @transform_1, window_bounds = array<i64: 3, 64>}, {pipeline_mode = #tpu.pipeline_mode<synchronous>, transform_indices = @transform_2, window_bounds = array<i64: 1, 64>}, {pipeline_mode = #tpu.pipeline_mode<synchronous>, transform_indices = @transform_3, window_bounds = array<i64: 64, 128>}, {pipeline_mode = #tpu.pipeline_mode<synchronous>, transform_indices = @transform_4, window_bounds = array<i64: 1, 128>}, {transform_indices = @transform_5, window_bounds = array<i64: 96, 128>}, {transform_indices = @transform_6, window_bounds = array<i64: 1, 2, 128>}]} {
    %c0 = arith.constant 0 : index
    %c0_0 = arith.constant 0 : index
    %0 = vector.load %arg1[%c0, %c0_0] : memref<96x3xf32, #tpu.memory_space<vmem>>, vector<96x3xf32>
    %c0_1 = arith.constant 0 : index
    %c0_2 = arith.constant 0 : index
    %1 = vector.load %arg3[%c0_1, %c0_2] : memref<1x64xf32, #tpu.memory_space<vmem>>, vector<1x64xf32>
    %2 = vector.extract_strided_slice %0 {offsets = [0, 0], sizes = [96, 1], strides = [1, 1]} : vector<96x3xf32> to vector<96x1xf32>
    %c0_3 = arith.constant 0 : index
    %c0_4 = arith.constant 0 : index
    %3 = vector.load %arg2[%c0_3, %c0_4] : memref<3x64xf32, #tpu.memory_space<vmem>>, vector<1x64xf32>
    %4 = vector.broadcast %2 : vector<96x1xf32> to vector<96x64xf32>
    %5 = vector.broadcast %3 : vector<1x64xf32> to vector<96x64xf32>
    %6 = arith.mulf %4, %5 : vector<96x64xf32>
    %7 = vector.broadcast %1 : vector<1x64xf32> to vector<96x64xf32>
    %8 = arith.addf %7, %6 : vector<96x64xf32>
    %9 = vector.extract_strided_slice %0 {offsets = [0, 1], sizes = [96, 1], strides = [1, 1]} : vector<96x3xf32> to vector<96x1xf32>
    %c1 = arith.constant 1 : index
    %c0_5 = arith.constant 0 : index
    %10 = vector.load %arg2[%c1, %c0_5] : memref<3x64xf32, #tpu.memory_space<vmem>>, vector<1x64xf32>
    %11 = vector.broadcast %9 : vector<96x1xf32> to vector<96x64xf32>
    %12 = vector.broadcast %10 : vector<1x64xf32> to vector<96x64xf32>
    %13 = arith.mulf %11, %12 : vector<96x64xf32>
    %14 = arith.addf %8, %13 : vector<96x64xf32>
    %15 = vector.extract_strided_slice %0 {offsets = [0, 2], sizes = [96, 1], strides = [1, 1]} : vector<96x3xf32> to vector<96x1xf32>
    %c2 = arith.constant 2 : index
    %c0_6 = arith.constant 0 : index
    %16 = vector.load %arg2[%c2, %c0_6] : memref<3x64xf32, #tpu.memory_space<vmem>>, vector<1x64xf32>
    %17 = vector.broadcast %15 : vector<96x1xf32> to vector<96x64xf32>
    %18 = vector.broadcast %16 : vector<1x64xf32> to vector<96x64xf32>
    %19 = arith.mulf %17, %18 : vector<96x64xf32>
    %20 = arith.addf %14, %19 : vector<96x64xf32>
    %cst = arith.constant 0.000000e+00 : f32
    %21 = vector.broadcast %cst : f32 to vector<96x64xf32>
    %22 = arith.maximumf %20, %21 : vector<96x64xf32>
    %23 = arith.truncf %22 : vector<96x64xf32> to vector<96x64xbf16>
    %c0_7 = arith.constant 0 : index
    %c0_8 = arith.constant 0 : index
    %24 = vector.load %arg4[%c0_7, %c0_8] : memref<64x128xbf16, #tpu.memory_space<vmem>>, vector<64x128xbf16>
    %cst_9 = arith.constant dense<0.000000e+00> : vector<96x128xf32>
    %25 = tpu.matmul %23, %24, %cst_9 {dimension_numbers = #tpu.dot_dimension_numbers<[1], [0], [0], [1], [0, 0, 1, 1], [], []>} : vector<96x64xbf16>, vector<64x128xbf16>, vector<96x128xf32> -> vector<96x128xf32>
    %c0_10 = arith.constant 0 : index
    %c0_11 = arith.constant 0 : index
    %26 = vector.load %arg5[%c0_10, %c0_11] : memref<1x128xf32, #tpu.memory_space<vmem>>, vector<1x128xf32>
    %27 = vector.broadcast %26 : vector<1x128xf32> to vector<96x128xf32>
    %28 = arith.addf %25, %27 : vector<96x128xf32>
    %c96_i32 = arith.constant 96 : i32
    %29 = arith.muli %arg0, %c96_i32 : i32
    %30 = tpu.iota {dimensions = array<i32: 0>} : vector<96x1xi32>
    %31 = vector.broadcast %29 : i32 to vector<96x1xi32>
    %32 = arith.addi %31, %30 : vector<96x1xi32>
    %c95_i32 = arith.constant 95 : i32
    %33 = vector.broadcast %c95_i32 : i32 to vector<96x1xi32>
    %34 = arith.cmpi slt, %32, %33 : vector<96x1xi32>
    %35 = arith.extui %34 : vector<96x1xi1> to vector<96x1xi32>
    %36 = arith.sitofp %35 : vector<96x1xi32> to vector<96x1xf32>
    %37 = vector.broadcast %36 : vector<96x1xf32> to vector<96x128xf32>
    %38 = arith.mulf %28, %37 : vector<96x128xf32>
    %cst_12 = arith.constant dense<0.000000e+00> : vector<128xf32>
    %39 = vector.multi_reduction <add>, %38, %cst_12 [0] : vector<96x128xf32> to vector<128xf32>
    %40 = vector.shape_cast %39 : vector<128xf32> to vector<1x128xf32>
    %41 = arith.mulf %38, %38 : vector<96x128xf32>
    %cst_13 = arith.constant dense<0.000000e+00> : vector<128xf32>
    %42 = vector.multi_reduction <add>, %41, %cst_13 [0] : vector<96x128xf32> to vector<128xf32>
    %43 = vector.shape_cast %42 : vector<128xf32> to vector<1x128xf32>
    %44 = tpu.concatenate %40, %43 in 0 : vector<1x128xf32>, vector<1x128xf32> -> vector<2x128xf32>
    %c0_14 = arith.constant 0 : index
    %c0_15 = arith.constant 0 : index
    %c0_16 = arith.constant 0 : index
    %45 = vector.load %arg7[%c0_14, %c0_15, %c0_16] : memref<1x2x128xf32, #tpu.memory_space<vmem>>, vector<1x2x128xf32>
    %46 = vector.shape_cast %45 : vector<1x2x128xf32> to vector<2x128xf32>
    %47 = vector.shape_cast %44 : vector<2x128xf32> to vector<1x2x128xf32>
    tpu.vector_store %arg7[%c0_14, %c0_15, %c0_16], %47 {strides = array<i32>} : memref<1x2x128xf32, #tpu.memory_space<vmem>>, vector<1x2x128xf32>,
    %48 = arith.truncf %38 : vector<96x128xf32> to vector<96x128xbf16>
    %c0_17 = arith.constant 0 : index
    %c0_18 = arith.constant 0 : index
    %49 = vector.load %arg6[%c0_17, %c0_18] : memref<96x128xbf16, #tpu.memory_space<vmem>>, vector<96x128xbf16>
    tpu.vector_store %arg6[%c0_17, %c0_18], %48 {strides = array<i32>} : memref<96x128xbf16, #tpu.memory_space<vmem>>, vector<96x128xbf16>,
    return
  }
  func.func @transform_0(%arg0: i32) -> (i32, i32) {
    %c0_i32 = arith.constant 0 : i32
    %c0_i32_0 = arith.constant 0 : i32
    return %arg0, %c0_i32 : i32, i32
  }
  func.func @transform_1(%arg0: i32) -> (i32, i32) {
    %c0_i32 = arith.constant 0 : i32
    %c0_i32_0 = arith.constant 0 : i32
    %c0_i32_1 = arith.constant 0 : i32
    return %c0_i32, %c0_i32_0 : i32, i32
  }
  func.func @transform_2(%arg0: i32) -> (i32, i32) {
    %c0_i32 = arith.constant 0 : i32
    %c0_i32_0 = arith.constant 0 : i32
    %c0_i32_1 = arith.constant 0 : i32
    return %c0_i32, %c0_i32_0 : i32, i32
  }
  func.func @transform_3(%arg0: i32) -> (i32, i32) {
    %c0_i32 = arith.constant 0 : i32
    %c0_i32_0 = arith.constant 0 : i32
    %c0_i32_1 = arith.constant 0 : i32
    return %c0_i32, %c0_i32_0 : i32, i32
  }
  func.func @transform_4(%arg0: i32) -> (i32, i32) {
    %c0_i32 = arith.constant 0 : i32
    %c0_i32_0 = arith.constant 0 : i32
    %c0_i32_1 = arith.constant 0 : i32
    return %c0_i32, %c0_i32_0 : i32, i32
  }
  func.func @transform_5(%arg0: i32) -> (i32, i32) {
    %c0_i32 = arith.constant 0 : i32
    %c0_i32_0 = arith.constant 0 : i32
    return %arg0, %c0_i32 : i32, i32
  }
  func.func @transform_6(%arg0: i32) -> (i32, i32, i32) {
    %c0_i32 = arith.constant 0 : i32
    %c0_i32_0 = arith.constant 0 : i32
    %c0_i32_1 = arith.constant 0 : i32
    return %arg0, %c0_i32, %c0_i32_0 : i32, i32, i32
  }
}

module attributes {stable_mosaic.version = 11 : i64} {
  func.func @_last_layer_kernel(%arg0: i32, %arg1: memref<1x256xf32, #tpu.memory_space<vmem>>, %arg2: memref<1x256xf32, #tpu.memory_space<vmem>>, %arg3: memref<256x64xbf16, #tpu.memory_space<vmem>>, %arg4: memref<1x64xf32, #tpu.memory_space<vmem>>, %arg5: memref<64x16xbf16, #tpu.memory_space<vmem>>, %arg6: memref<1x16xf32, #tpu.memory_space<vmem>>, %arg7: memref<96x256xbf16, #tpu.memory_space<vmem>>, %arg8: memref<96x16xf32, #tpu.memory_space<vmem>>) attributes {dimension_semantics = [#tpu.dimension_semantics<parallel>], iteration_bounds = array<i64: 1>, scalar_prefetch = 0 : i64, scratch_operands = 0 : i64, tpu.core_type = #tpu.core_type<tc>, window_params = [{pipeline_mode = #tpu.pipeline_mode<synchronous>, transform_indices = @transform_0, window_bounds = array<i64: 1, 256>}, {pipeline_mode = #tpu.pipeline_mode<synchronous>, transform_indices = @transform_1, window_bounds = array<i64: 1, 256>}, {pipeline_mode = #tpu.pipeline_mode<synchronous>, transform_indices = @transform_2, window_bounds = array<i64: 256, 64>}, {pipeline_mode = #tpu.pipeline_mode<synchronous>, transform_indices = @transform_3, window_bounds = array<i64: 1, 64>}, {pipeline_mode = #tpu.pipeline_mode<synchronous>, transform_indices = @transform_4, window_bounds = array<i64: 64, 16>}, {pipeline_mode = #tpu.pipeline_mode<synchronous>, transform_indices = @transform_5, window_bounds = array<i64: 1, 16>}, {transform_indices = @transform_6, window_bounds = array<i64: 96, 256>}, {transform_indices = @transform_7, window_bounds = array<i64: 96, 16>}]} {
    %c0 = arith.constant 0 : index
    %c0_0 = arith.constant 0 : index
    %0 = vector.load %arg7[%c0, %c0_0] : memref<96x256xbf16, #tpu.memory_space<vmem>>, vector<96x256xbf16>
    %1 = arith.extf %0 : vector<96x256xbf16> to vector<96x256xf32>
    %c0_1 = arith.constant 0 : index
    %c0_2 = arith.constant 0 : index
    %2 = vector.load %arg1[%c0_1, %c0_2] : memref<1x256xf32, #tpu.memory_space<vmem>>, vector<1x256xf32>
    %3 = vector.broadcast %2 : vector<1x256xf32> to vector<96x256xf32>
    %4 = arith.mulf %1, %3 : vector<96x256xf32>
    %c0_3 = arith.constant 0 : index
    %c0_4 = arith.constant 0 : index
    %5 = vector.load %arg2[%c0_3, %c0_4] : memref<1x256xf32, #tpu.memory_space<vmem>>, vector<1x256xf32>
    %6 = vector.broadcast %5 : vector<1x256xf32> to vector<96x256xf32>
    %7 = arith.addf %4, %6 : vector<96x256xf32>
    %cst = arith.constant 0.000000e+00 : f32
    %8 = vector.broadcast %cst : f32 to vector<96x256xf32>
    %9 = arith.maximumf %7, %8 : vector<96x256xf32>
    %10 = arith.truncf %9 : vector<96x256xf32> to vector<96x256xbf16>
    %c0_5 = arith.constant 0 : index
    %c0_6 = arith.constant 0 : index
    %11 = vector.load %arg3[%c0_5, %c0_6] : memref<256x64xbf16, #tpu.memory_space<vmem>>, vector<256x64xbf16>
    %cst_7 = arith.constant dense<0.000000e+00> : vector<96x64xf32>
    %12 = tpu.matmul %10, %11, %cst_7 {dimension_numbers = #tpu.dot_dimension_numbers<[1], [0], [0], [1], [0, 0, 1, 1], [], []>} : vector<96x256xbf16>, vector<256x64xbf16>, vector<96x64xf32> -> vector<96x64xf32>
    %c0_8 = arith.constant 0 : index
    %c0_9 = arith.constant 0 : index
    %13 = vector.load %arg4[%c0_8, %c0_9] : memref<1x64xf32, #tpu.memory_space<vmem>>, vector<1x64xf32>
    %14 = vector.broadcast %13 : vector<1x64xf32> to vector<96x64xf32>
    %15 = arith.addf %12, %14 : vector<96x64xf32>
    %16 = arith.truncf %15 : vector<96x64xf32> to vector<96x64xbf16>
    %c0_10 = arith.constant 0 : index
    %c0_11 = arith.constant 0 : index
    %17 = vector.load %arg5[%c0_10, %c0_11] : memref<64x16xbf16, #tpu.memory_space<vmem>>, vector<64x16xbf16>
    %cst_12 = arith.constant dense<0.000000e+00> : vector<96x16xf32>
    %18 = tpu.matmul %16, %17, %cst_12 {dimension_numbers = #tpu.dot_dimension_numbers<[1], [0], [0], [1], [0, 0, 1, 1], [], []>} : vector<96x64xbf16>, vector<64x16xbf16>, vector<96x16xf32> -> vector<96x16xf32>
    %c0_13 = arith.constant 0 : index
    %c0_14 = arith.constant 0 : index
    %19 = vector.load %arg6[%c0_13, %c0_14] : memref<1x16xf32, #tpu.memory_space<vmem>>, vector<1x16xf32>
    %20 = vector.broadcast %19 : vector<1x16xf32> to vector<96x16xf32>
    %21 = arith.addf %18, %20 : vector<96x16xf32>
    %cst_15 = arith.constant 0.000000e+00 : f32
    %22 = vector.broadcast %cst_15 : f32 to vector<96x16xf32>
    %23 = arith.maximumf %21, %22 : vector<96x16xf32>
    %c0_16 = arith.constant 0 : index
    %c0_17 = arith.constant 0 : index
    %24 = vector.load %arg8[%c0_16, %c0_17] : memref<96x16xf32, #tpu.memory_space<vmem>>, vector<96x16xf32>
    tpu.vector_store %arg8[%c0_16, %c0_17], %23 {strides = array<i32>} : memref<96x16xf32, #tpu.memory_space<vmem>>, vector<96x16xf32>,
    return
  }
  func.func @transform_0(%arg0: i32) -> (i32, i32) {
    %c0_i32 = arith.constant 0 : i32
    %c0_i32_0 = arith.constant 0 : i32
    %c0_i32_1 = arith.constant 0 : i32
    return %c0_i32, %c0_i32_0 : i32, i32
  }
  func.func @transform_1(%arg0: i32) -> (i32, i32) {
    %c0_i32 = arith.constant 0 : i32
    %c0_i32_0 = arith.constant 0 : i32
    %c0_i32_1 = arith.constant 0 : i32
    return %c0_i32, %c0_i32_0 : i32, i32
  }
  func.func @transform_2(%arg0: i32) -> (i32, i32) {
    %c0_i32 = arith.constant 0 : i32
    %c0_i32_0 = arith.constant 0 : i32
    %c0_i32_1 = arith.constant 0 : i32
    return %c0_i32, %c0_i32_0 : i32, i32
  }
  func.func @transform_3(%arg0: i32) -> (i32, i32) {
    %c0_i32 = arith.constant 0 : i32
    %c0_i32_0 = arith.constant 0 : i32
    %c0_i32_1 = arith.constant 0 : i32
    return %c0_i32, %c0_i32_0 : i32, i32
  }
  func.func @transform_4(%arg0: i32) -> (i32, i32) {
    %c0_i32 = arith.constant 0 : i32
    %c0_i32_0 = arith.constant 0 : i32
    %c0_i32_1 = arith.constant 0 : i32
    return %c0_i32, %c0_i32_0 : i32, i32
  }
  func.func @transform_5(%arg0: i32) -> (i32, i32) {
    %c0_i32 = arith.constant 0 : i32
    %c0_i32_0 = arith.constant 0 : i32
    %c0_i32_1 = arith.constant 0 : i32
    return %c0_i32, %c0_i32_0 : i32, i32
  }
  func.func @transform_6(%arg0: i32) -> (i32, i32) {
    %c0_i32 = arith.constant 0 : i32
    %c0_i32_0 = arith.constant 0 : i32
    return %arg0, %c0_i32 : i32, i32
  }
  func.func @transform_7(%arg0: i32) -> (i32, i32) {
    %c0_i32 = arith.constant 0 : i32
    %c0_i32_0 = arith.constant 0 : i32
    return %arg0, %c0_i32 : i32, i32
  }
}

module attributes {stable_mosaic.version = 11 : i64} {
  func.func @_mid_layer_kernel(%arg0: i32, %arg1: memref<1x128xf32, #tpu.memory_space<vmem>>, %arg2: memref<1x128xf32, #tpu.memory_space<vmem>>, %arg3: memref<128x256xbf16, #tpu.memory_space<vmem>>, %arg4: memref<1x256xf32, #tpu.memory_space<vmem>>, %arg5: memref<96x128xbf16, #tpu.memory_space<vmem>>, %arg6: memref<96x256xbf16, #tpu.memory_space<vmem>>, %arg7: memref<1x2x256xf32, #tpu.memory_space<vmem>>) attributes {dimension_semantics = [#tpu.dimension_semantics<parallel>], iteration_bounds = array<i64: 1>, scalar_prefetch = 0 : i64, scratch_operands = 0 : i64, tpu.core_type = #tpu.core_type<tc>, window_params = [{pipeline_mode = #tpu.pipeline_mode<synchronous>, transform_indices = @transform_0, window_bounds = array<i64: 1, 128>}, {pipeline_mode = #tpu.pipeline_mode<synchronous>, transform_indices = @transform_1, window_bounds = array<i64: 1, 128>}, {pipeline_mode = #tpu.pipeline_mode<synchronous>, transform_indices = @transform_2, window_bounds = array<i64: 128, 256>}, {pipeline_mode = #tpu.pipeline_mode<synchronous>, transform_indices = @transform_3, window_bounds = array<i64: 1, 256>}, {transform_indices = @transform_4, window_bounds = array<i64: 96, 128>}, {transform_indices = @transform_5, window_bounds = array<i64: 96, 256>}, {transform_indices = @transform_6, window_bounds = array<i64: 1, 2, 256>}]} {
    %c0 = arith.constant 0 : index
    %c0_0 = arith.constant 0 : index
    %0 = vector.load %arg5[%c0, %c0_0] : memref<96x128xbf16, #tpu.memory_space<vmem>>, vector<96x128xbf16>
    %1 = arith.extf %0 : vector<96x128xbf16> to vector<96x128xf32>
    %c0_1 = arith.constant 0 : index
    %c0_2 = arith.constant 0 : index
    %2 = vector.load %arg1[%c0_1, %c0_2] : memref<1x128xf32, #tpu.memory_space<vmem>>, vector<1x128xf32>
    %3 = vector.broadcast %2 : vector<1x128xf32> to vector<96x128xf32>
    %4 = arith.mulf %1, %3 : vector<96x128xf32>
    %c0_3 = arith.constant 0 : index
    %c0_4 = arith.constant 0 : index
    %5 = vector.load %arg2[%c0_3, %c0_4] : memref<1x128xf32, #tpu.memory_space<vmem>>, vector<1x128xf32>
    %6 = vector.broadcast %5 : vector<1x128xf32> to vector<96x128xf32>
    %7 = arith.addf %4, %6 : vector<96x128xf32>
    %cst = arith.constant 0.000000e+00 : f32
    %8 = vector.broadcast %cst : f32 to vector<96x128xf32>
    %9 = arith.maximumf %7, %8 : vector<96x128xf32>
    %10 = arith.truncf %9 : vector<96x128xf32> to vector<96x128xbf16>
    %c0_5 = arith.constant 0 : index
    %c0_6 = arith.constant 0 : index
    %11 = vector.load %arg3[%c0_5, %c0_6] : memref<128x256xbf16, #tpu.memory_space<vmem>>, vector<128x256xbf16>
    %cst_7 = arith.constant dense<0.000000e+00> : vector<96x256xf32>
    %12 = tpu.matmul %10, %11, %cst_7 {dimension_numbers = #tpu.dot_dimension_numbers<[1], [0], [0], [1], [0, 0, 1, 1], [], []>} : vector<96x128xbf16>, vector<128x256xbf16>, vector<96x256xf32> -> vector<96x256xf32>
    %c0_8 = arith.constant 0 : index
    %c0_9 = arith.constant 0 : index
    %13 = vector.load %arg4[%c0_8, %c0_9] : memref<1x256xf32, #tpu.memory_space<vmem>>, vector<1x256xf32>
    %14 = vector.broadcast %13 : vector<1x256xf32> to vector<96x256xf32>
    %15 = arith.addf %12, %14 : vector<96x256xf32>
    %c96_i32 = arith.constant 96 : i32
    %16 = arith.muli %arg0, %c96_i32 : i32
    %17 = tpu.iota {dimensions = array<i32: 0>} : vector<96x1xi32>
    %18 = vector.broadcast %16 : i32 to vector<96x1xi32>
    %19 = arith.addi %18, %17 : vector<96x1xi32>
    %c95_i32 = arith.constant 95 : i32
    %20 = vector.broadcast %c95_i32 : i32 to vector<96x1xi32>
    %21 = arith.cmpi slt, %19, %20 : vector<96x1xi32>
    %22 = arith.extui %21 : vector<96x1xi1> to vector<96x1xi32>
    %23 = arith.sitofp %22 : vector<96x1xi32> to vector<96x1xf32>
    %24 = vector.broadcast %23 : vector<96x1xf32> to vector<96x256xf32>
    %25 = arith.mulf %15, %24 : vector<96x256xf32>
    %cst_10 = arith.constant dense<0.000000e+00> : vector<256xf32>
    %26 = vector.multi_reduction <add>, %25, %cst_10 [0] : vector<96x256xf32> to vector<256xf32>
    %27 = vector.shape_cast %26 : vector<256xf32> to vector<1x256xf32>
    %28 = arith.mulf %25, %25 : vector<96x256xf32>
    %cst_11 = arith.constant dense<0.000000e+00> : vector<256xf32>
    %29 = vector.multi_reduction <add>, %28, %cst_11 [0] : vector<96x256xf32> to vector<256xf32>
    %30 = vector.shape_cast %29 : vector<256xf32> to vector<1x256xf32>
    %31 = tpu.concatenate %27, %30 in 0 : vector<1x256xf32>, vector<1x256xf32> -> vector<2x256xf32>
    %c0_12 = arith.constant 0 : index
    %c0_13 = arith.constant 0 : index
    %c0_14 = arith.constant 0 : index
    %32 = vector.load %arg7[%c0_12, %c0_13, %c0_14] : memref<1x2x256xf32, #tpu.memory_space<vmem>>, vector<1x2x256xf32>
    %33 = vector.shape_cast %32 : vector<1x2x256xf32> to vector<2x256xf32>
    %34 = vector.shape_cast %31 : vector<2x256xf32> to vector<1x2x256xf32>
    tpu.vector_store %arg7[%c0_12, %c0_13, %c0_14], %34 {strides = array<i32>} : memref<1x2x256xf32, #tpu.memory_space<vmem>>, vector<1x2x256xf32>,
    %35 = arith.truncf %25 : vector<96x256xf32> to vector<96x256xbf16>
    %c0_15 = arith.constant 0 : index
    %c0_16 = arith.constant 0 : index
    %36 = vector.load %arg6[%c0_15, %c0_16] : memref<96x256xbf16, #tpu.memory_space<vmem>>, vector<96x256xbf16>
    tpu.vector_store %arg6[%c0_15, %c0_16], %35 {strides = array<i32>} : memref<96x256xbf16, #tpu.memory_space<vmem>>, vector<96x256xbf16>,
    return
  }
  func.func @transform_0(%arg0: i32) -> (i32, i32) {
    %c0_i32 = arith.constant 0 : i32
    %c0_i32_0 = arith.constant 0 : i32
    %c0_i32_1 = arith.constant 0 : i32
    return %c0_i32, %c0_i32_0 : i32, i32
  }
  func.func @transform_1(%arg0: i32) -> (i32, i32) {
    %c0_i32 = arith.constant 0 : i32
    %c0_i32_0 = arith.constant 0 : i32
    %c0_i32_1 = arith.constant 0 : i32
    return %c0_i32, %c0_i32_0 : i32, i32
  }
  func.func @transform_2(%arg0: i32) -> (i32, i32) {
    %c0_i32 = arith.constant 0 : i32
    %c0_i32_0 = arith.constant 0 : i32
    %c0_i32_1 = arith.constant 0 : i32
    return %c0_i32, %c0_i32_0 : i32, i32
  }
  func.func @transform_3(%arg0: i32) -> (i32, i32) {
    %c0_i32 = arith.constant 0 : i32
    %c0_i32_0 = arith.constant 0 : i32
    %c0_i32_1 = arith.constant 0 : i32
    return %c0_i32, %c0_i32_0 : i32, i32
  }
  func.func @transform_4(%arg0: i32) -> (i32, i32) {
    %c0_i32 = arith.constant 0 : i32
    %c0_i32_0 = arith.constant 0 : i32
    return %arg0, %c0_i32 : i32, i32
  }
  func.func @transform_5(%arg0: i32) -> (i32, i32) {
    %c0_i32 = arith.constant 0 : i32
    %c0_i32_0 = arith.constant 0 : i32
    return %arg0, %c0_i32 : i32, i32
  }
  func.func @transform_6(%arg0: i32) -> (i32, i32, i32) {
    %c0_i32 = arith.constant 0 : i32
    %c0_i32_0 = arith.constant 0 : i32
    %c0_i32_1 = arith.constant 0 : i32
    return %arg0, %c0_i32, %c0_i32_0 : i32, i32, i32
  }
}

</mosaic_0001>

<llo_original>
// kernel: _ppmodel_forward.3
$region0: #{_ppmodel_forward.3}
  #allocation0 [shape = 'u32[]', space=smem, size = 0x4, offset = 0x4, fixed_abs, tag = 'smem constant byte address 0x4 - core index']
  #allocation1 [shape = 'u32[144,128]{1,0:T(1,128)}', space=vmem, size = 0x12000, scoped, tag = 'internal scratch']
  %s0 = inlined_call_operand.vmem [shape: f32[96,3], index: 0, kind: input, shape index: {}]
  %s1 = inlined_call_operand.vmem [shape: f32[3,64], index: 1, kind: input, shape index: {}]
  %s2 = inlined_call_operand.vmem [shape: f32[1,64], index: 2, kind: input, shape index: {}]
  %s3 = inlined_call_operand.vmem [shape: bf16[64,128], index: 3, kind: input, shape index: {}]
  %s4 = inlined_call_operand.vmem [shape: f32[1,128], index: 4, kind: input, shape index: {}]
  %s5 = inlined_call_operand.vmem [shape: bf16[96,128], index: 5, kind: output, shape index: {0}]
  %s6 = inlined_call_operand.vmem [shape: f32[1,2,128], index: 6, kind: output, shape index: {1}]
  %7 = xla_tuple %s5, %s6
  %s8 = sld [smem:[#allocation0]]
  $region38: #{_ppmodel_forward.3} parent=0
    _
  %s10 = ssub.s32 1, %s8
  %s11 = scalar_select 0, %s10, %s8
  // Predicated region
  $region2: #{_ppmodel_forward.3} parent=0 // pred_check
    _
  $region3: #{_ppmodel_forward.3} parent=0 // pred_check_branch
    %13 = sbr.rel (0) target = $region5
  $region4: #{_ppmodel_forward.3} parent=0 // pred_region
    _
  $region5: #{_ppmodel_forward.3} parent=0 // pred_fallthru
    _
  // Predicated region
  $region6: #{_ppmodel_forward.3} parent=0 // pred_check
    _
  $region7: #{_ppmodel_forward.3} parent=0 // pred_check_branch
    %15 = sbr.rel (0) target = $region9
  $region8: #{_ppmodel_forward.3} parent=0 // pred_region
    _
  $region9: #{_ppmodel_forward.3} parent=0 // pred_fallthru
    _
  // Predicated region
  $region10: #{_ppmodel_forward.3} parent=0 // pred_check
    _
  $region11: #{_ppmodel_forward.3} parent=0 // pred_check_branch
    %17 = sbr.rel (0) target = $region13
  $region12: #{_ppmodel_forward.3} parent=0 // pred_region
    _
  $region13: #{_ppmodel_forward.3} parent=0 // pred_fallthru
    _
  // Predicated region
  $region14: #{_ppmodel_forward.3} parent=0 // pred_check
    _
  $region15: #{_ppmodel_forward.3} parent=0 // pred_check_branch
    %19 = sbr.rel (0) target = $region17
  $region16: #{_ppmodel_forward.3} parent=0 // pred_region
    _
  $region17: #{_ppmodel_forward.3} parent=0 // pred_fallthru
    _
  // Predicated region
  $region18: #{_ppmodel_forward.3} parent=0 // pred_check
    _
  $region19: #{_ppmodel_forward.3} parent=0 // pred_check_branch
    %21 = sbr.rel (0) target = $region21
  $region20: #{_ppmodel_forward.3} parent=0 // pred_region
    _
  $region21: #{_ppmodel_forward.3} parent=0 // pred_fallthru
    _
  %v23 = vld [vmem:[%s0] sm:$0xff]
  %v24 = vld [vmem:[%s0 + $0x8] sm:$0xff]
  %v25 = vld [vmem:[%s0 + $0x10] sm:$0xff]
  %v26 = vld [vmem:[%s0 + $0x18] sm:$0xff]
  %v27 = vld [vmem:[%s0 + $0x20] sm:$0xff]
  %v28 = vld [vmem:[%s0 + $0x28] sm:$0xff]
  %v29 = vld [vmem:[%s0 + $0x30] sm:$0xff]
  %v30 = vld [vmem:[%s0 + $0x38] sm:$0xff]
  %v31 = vld [vmem:[%s0 + $0x40] sm:$0xff]
  %v32 = vld [vmem:[%s0 + $0x48] sm:$0xff]
  %v33 = vld [vmem:[%s0 + $0x50] sm:$0xff]
  %v34 = vld [vmem:[%s0 + $0x58] sm:$0xff]
  %v35 = vld [vmem:[%s2] sm:$0x1]
  %v36 = vld [vmem:[%s1] sm:$0x1]
  %38 = vset.pattern.permute.xlu0 0
  %39 = vperm.xlu0 %38, %v23
  %v40 = vpop.permute.xlu0 %39
  %43 = vset.pattern.permute.xlu0 0
  %44 = vperm.xlu0 %43, %v24
  %v45 = vpop.permute.xlu0 %44
  %48 = vset.pattern.permute.xlu0 0
  %49 = vperm.xlu0 %48, %v25
  %v50 = vpop.permute.xlu0 %49
  %53 = vset.pattern.permute.xlu0 0
  %54 = vperm.xlu0 %53, %v26
  %v55 = vpop.permute.xlu0 %54
  %58 = vset.pattern.permute.xlu0 0
  %59 = vperm.xlu0 %58, %v27
  %v60 = vpop.permute.xlu0 %59
  %63 = vset.pattern.permute.xlu0 0
  %64 = vperm.xlu0 %63, %v28
  %v65 = vpop.permute.xlu0 %64
  %68 = vset.pattern.permute.xlu0 0
  %69 = vperm.xlu0 %68, %v29
  %v70 = vpop.permute.xlu0 %69
  %73 = vset.pattern.permute.xlu0 0
  %74 = vperm.xlu0 %73, %v30
  %v75 = vpop.permute.xlu0 %74
  %78 = vset.pattern.permute.xlu0 0
  %79 = vperm.xlu0 %78, %v31
  %v80 = vpop.permute.xlu0 %79
  %83 = vset.pattern.permute.xlu0 0
  %84 = vperm.xlu0 %83, %v32
  %v85 = vpop.permute.xlu0 %84
  %88 = vset.pattern.permute.xlu0 0
  %89 = vperm.xlu0 %88, %v33
  %v90 = vpop.permute.xlu0 %89
  %93 = vset.pattern.permute.xlu0 0
  %94 = vperm.xlu0 %93, %v34
  %v95 = vpop.permute.xlu0 %94
  %v97 = vlaneseq
  %v98 = vshrl.u32 %v97, 7
  %v99 = vsub.s32 0, %v98
  %v100 = vrot.slane %v36, %v99
  %v101 = vmul.f32 %v40, %v100
  %v102 = vmul.f32 %v45, %v100
  %v103 = vmul.f32 %v50, %v100
  %v104 = vmul.f32 %v55, %v100
  %v105 = vmul.f32 %v60, %v100
  %v106 = vmul.f32 %v65, %v100
  %v107 = vmul.f32 %v70, %v100
  %v108 = vmul.f32 %v75, %v100
  %v109 = vmul.f32 %v80, %v100
  %v110 = vmul.f32 %v85, %v100
  %v111 = vmul.f32 %v90, %v100
  %v112 = vmul.f32 %v95, %v100
  %v114 = vlaneseq
  %v115 = vshrl.u32 %v114, 7
  %v116 = vsub.s32 0, %v115
  %v117 = vrot.slane %v35, %v116
  %v119 = vadd.f32 %v117, %v101
  %v120 = vadd.f32 %v117, %v102
  %v121 = vadd.f32 %v117, %v103
  %v122 = vadd.f32 %v117, %v104
  %v123 = vadd.f32 %v117, %v105
  %v124 = vadd.f32 %v117, %v106
  %v125 = vadd.f32 %v117, %v107
  %v126 = vadd.f32 %v117, %v108
  %v127 = vadd.f32 %v117, %v109
  %v128 = vadd.f32 %v117, %v110
  %v129 = vadd.f32 %v117, %v111
  %v130 = vadd.f32 %v117, %v112
  %v131 = vld [vmem:[%s1 + $0x1] sm:$0x1]
  %132 = vset.pattern.permute.xlu0 1
  %133 = vperm.xlu0 %132, %v23
  %v134 = vpop.permute.xlu0 %133
  %136 = vset.pattern.permute.xlu0 1
  %137 = vperm.xlu0 %136, %v24
  %v138 = vpop.permute.xlu0 %137
  %140 = vset.pattern.permute.xlu0 1
  %141 = vperm.xlu0 %140, %v25
  %v142 = vpop.permute.xlu0 %141
  %144 = vset.pattern.permute.xlu0 1
  %145 = vperm.xlu0 %144, %v26
  %v146 = vpop.permute.xlu0 %145
  %148 = vset.pattern.permute.xlu0 1
  %149 = vperm.xlu0 %148, %v27
  %v150 = vpop.permute.xlu0 %149
  %152 = vset.pattern.permute.xlu0 1
  %153 = vperm.xlu0 %152, %v28
  %v154 = vpop.permute.xlu0 %153
  %156 = vset.pattern.permute.xlu0 1
  %157 = vperm.xlu0 %156, %v29
  %v158 = vpop.permute.xlu0 %157
  %160 = vset.pattern.permute.xlu0 1
  %161 = vperm.xlu0 %160, %v30
  %v162 = vpop.permute.xlu0 %161
  %164 = vset.pattern.permute.xlu0 1
  %165 = vperm.xlu0 %164, %v31
  %v166 = vpop.permute.xlu0 %165
  %168 = vset.pattern.permute.xlu0 1
  %169 = vperm.xlu0 %168, %v32
  %v170 = vpop.permute.xlu0 %169
  %172 = vset.pattern.permute.xlu0 1
  %173 = vperm.xlu0 %172, %v33
  %v174 = vpop.permute.xlu0 %173
  %176 = vset.pattern.permute.xlu0 1
  %177 = vperm.xlu0 %176, %v34
  %v178 = vpop.permute.xlu0 %177
  %v180 = vlaneseq
  %v181 = vshrl.u32 %v180, 7
  %v182 = vsub.s32 0, %v181
  %v183 = vrot.slane %v131, %v182
  %v184 = vmul.f32 %v134, %v183
  %v185 = vmul.f32 %v138, %v183
  %v186 = vmul.f32 %v142, %v183
  %v187 = vmul.f32 %v146, %v183
  %v188 = vmul.f32 %v150, %v183
  %v189 = vmul.f32 %v154, %v183
  %v190 = vmul.f32 %v158, %v183
  %v191 = vmul.f32 %v162, %v183
  %v192 = vmul.f32 %v166, %v183
  %v193 = vmul.f32 %v170, %v183
  %v194 = vmul.f32 %v174, %v183
  %v195 = vmul.f32 %v178, %v183
  %v196 = vadd.f32 %v119, %v184
  %v197 = vadd.f32 %v120, %v185
  %v198 = vadd.f32 %v121, %v186
  %v199 = vadd.f32 %v122, %v187
  %v200 = vadd.f32 %v123, %v188
  %v201 = vadd.f32 %v124, %v189
  %v202 = vadd.f32 %v125, %v190
  %v203 = vadd.f32 %v126, %v191
  %v204 = vadd.f32 %v127, %v192
  %v205 = vadd.f32 %v128, %v193
  %v206 = vadd.f32 %v129, %v194
  %v207 = vadd.f32 %v130, %v195
  %v208 = vld [vmem:[%s1 + $0x2] sm:$0x1]
  %209 = vset.pattern.permute.xlu0 2
  %210 = vperm.xlu0 %209, %v23
  %v211 = vpop.permute.xlu0 %210
  %213 = vset.pattern.permute.xlu0 2
  %214 = vperm.xlu0 %213, %v24
  %v215 = vpop.permute.xlu0 %214
  %217 = vset.pattern.permute.xlu0 2
  %218 = vperm.xlu0 %217, %v25
  %v219 = vpop.permute.xlu0 %218
  %221 = vset.pattern.permute.xlu0 2
  %222 = vperm.xlu0 %221, %v26
  %v223 = vpop.permute.xlu0 %222
  %225 = vset.pattern.permute.xlu0 2
  %226 = vperm.xlu0 %225, %v27
  %v227 = vpop.permute.xlu0 %226
  %229 = vset.pattern.permute.xlu0 2
  %230 = vperm.xlu0 %229, %v28
  %v231 = vpop.permute.xlu0 %230
  %233 = vset.pattern.permute.xlu0 2
  %234 = vperm.xlu0 %233, %v29
  %v235 = vpop.permute.xlu0 %234
  %237 = vset.pattern.permute.xlu0 2
  %238 = vperm.xlu0 %237, %v30
  %v239 = vpop.permute.xlu0 %238
  %241 = vset.pattern.permute.xlu0 2
  %242 = vperm.xlu0 %241, %v31
  %v243 = vpop.permute.xlu0 %242
  %245 = vset.pattern.permute.xlu0 2
  %246 = vperm.xlu0 %245, %v32
  %v247 = vpop.permute.xlu0 %246
  %249 = vset.pattern.permute.xlu0 2
  %250 = vperm.xlu0 %249, %v33
  %v251 = vpop.permute.xlu0 %250
  %253 = vset.pattern.permute.xlu0 2
  %254 = vperm.xlu0 %253, %v34
  %v255 = vpop.permute.xlu0 %254
  %v257 = vlaneseq
  %v258 = vshrl.u32 %v257, 7
  %v259 = vsub.s32 0, %v258
  %v260 = vrot.slane %v208, %v259
  %v261 = vmul.f32 %v211, %v260
  %v262 = vmul.f32 %v215, %v260
  %v263 = vmul.f32 %v219, %v260
  %v264 = vmul.f32 %v223, %v260
  %v265 = vmul.f32 %v227, %v260
  %v266 = vmul.f32 %v231, %v260
  %v267 = vmul.f32 %v235, %v260
  %v268 = vmul.f32 %v239, %v260
  %v269 = vmul.f32 %v243, %v260
  %v270 = vmul.f32 %v247, %v260
  %v271 = vmul.f32 %v251, %v260
  %v272 = vmul.f32 %v255, %v260
  %v273 = vadd.f32 %v196, %v261
  %v274 = vadd.f32 %v197, %v262
  %v275 = vadd.f32 %v198, %v263
  %v276 = vadd.f32 %v199, %v264
  %v277 = vadd.f32 %v200, %v265
  %v278 = vadd.f32 %v201, %v266
  %v279 = vadd.f32 %v202, %v267
  %v280 = vadd.f32 %v203, %v268
  %v281 = vadd.f32 %v204, %v269
  %v282 = vadd.f32 %v205, %v270
  %v283 = vadd.f32 %v206, %v271
  %v284 = vadd.f32 %v207, %v272
  %v285 = vmax.f32 %v273, 0.0
  %v286 = vmax.f32 %v274, 0.0
  %v287 = vmax.f32 %v275, 0.0
  %v288 = vmax.f32 %v276, 0.0
  %v289 = vmax.f32 %v277, 0.0
  %v290 = vmax.f32 %v278, 0.0
  %v291 = vmax.f32 %v279, 0.0
  %v292 = vmax.f32 %v280, 0.0
  %v293 = vmax.f32 %v281, 0.0
  %v294 = vmax.f32 %v282, 0.0
  %v295 = vmax.f32 %v283, 0.0
  %v296 = vmax.f32 %v284, 0.0
  %v297 = vpack.c.bf16 %v286, %v285
  %v298 = vpack.c.bf16 %v288, %v287
  %v299 = vpack.c.bf16 %v290, %v289
  %v300 = vpack.c.bf16 %v292, %v291
  %v301 = vpack.c.bf16 %v294, %v293
  %v302 = vpack.c.bf16 %v296, %v295
  %v303 = vld [vmem:[%s3] sm:$0xf]
  %v304 = vld [vmem:[%s3 + $0x4] sm:$0xf]
  %v305 = vld [vmem:[%s3 + $0x8] sm:$0xf]
  %v306 = vld [vmem:[%s3 + $0xc] sm:$0xf]
  %v307 = vld [vmem:[%s3 + $0x10] sm:$0xf]
  %v308 = vld [vmem:[%s3 + $0x14] sm:$0xf]
  %v309 = vld [vmem:[%s3 + $0x18] sm:$0xf]
  %v310 = vld [vmem:[%s3 + $0x1c] sm:$0xf]
  %v311 = vld [vmem:[%s4] sm:$0x1]
  %v313 = vlaneseq
  %v314 = vshrl.u32 %v313, 7
  %v315 = vsub.s32 0, %v314
  %v316 = vrot.slane %v311, %v315
  %v326 = vunpack.c.l.b16 %v303
  %v327 = vunpack.c.l.b16 %v304
  %v328 = vunpack.c.l.b16 %v305
  %v329 = vunpack.c.l.b16 %v306
  %v330 = vunpack.c.l.b16 %v307
  %v331 = vunpack.c.l.b16 %v308
  %v332 = vunpack.c.l.b16 %v309
  %v333 = vunpack.c.l.b16 %v310
  %v334 = vpack.c.b16 %v327, %v326
  %v335 = vpack.c.b16 %v329, %v328
  %v336 = vpack.c.b16 %v331, %v330
  %v337 = vpack.c.b16 %v333, %v332
  %vm342 = vcmask 523264
  %v344 = vsel %vm342, %v297, 0
  %v347 = vsel %vm342, %v298, 0
  %v350 = vsel %vm342, %v299, 0
  %v353 = vsel %vm342, %v300, 0
  %v356 = vsel %vm342, %v301, 0
  %v359 = vsel %vm342, %v302, 0
  %361 = vmatprep.subr.bf16.mxu0 0
  %362 = vmatpush1.bf16.msra.mxu0 0
  %363 = vmatprep.subr.bf16.mxu0 0
  %364 = vmatpush1.bf16.msra.mxu0 0
  %365 = vmatprep.subr.bf16.mxu0 0
  %366 = vmatpush1.bf16.msra.mxu0 0
  %367 = vmatprep.subr.bf16.mxu0 0
  %368 = vmatpush1.bf16.msra.mxu0 0
  %369 = vmatprep.subr.bf16.mxu0 0
  %370 = vmatpush1.bf16.msra.mxu0 %v337
  %371 = vmatprep.subr.bf16.mxu0 0
  %372 = vmatpush1.bf16.msra.mxu0 %v336
  %373 = vmatprep.subr.bf16.mxu0 0
  %374 = vmatpush1.bf16.msra.mxu0 %v335
  %375 = vmatprep.subr.bf16.mxu0 0
  %376 = vmatpush1.bf16.msra.mxu0 %v334
  %377 = vmatprep.subr.bf16.mxu0 0
  %378 = vmatpush2.bf16.msra.mxu0 0
  %379 = vmatprep.subr.bf16.mxu0 0
  %380 = vmatpush2.bf16.msra.mxu0 0
  %381 = vmatprep.subr.bf16.mxu0 0
  %382 = vmatpush2.bf16.msra.mxu0 0
  %383 = vmatprep.subr.bf16.mxu0 0
  %384 = vmatpush2.bf16.msra.mxu0 0
  %385 = vmatprep.subr.bf16.mxu0 0
  %386 = vmatpush2.bf16.msra.mxu0 0
  %387 = vmatprep.subr.bf16.mxu0 0
  %388 = vmatpush2.bf16.msra.mxu0 0
  %389 = vmatprep.subr.bf16.mxu0 0
  %390 = vmatpush2.bf16.msra.mxu0 0
  %391 = vmatprep.subr.bf16.mxu0 0
  %392 = vmatpush2.bf16.msra.mxu0 0
  %393 = vmatprep.mubr.bf16.mxu0 0
  %394 = vmatmul.mubr.bf16.gmra.mxu0 %v344
  %v395 = vpop.f32.mrf.mxu0
  %v396 = vadd.f32 %v316, %v395
  %v397 = vpop.f32.mrf.mxu0
  %v398 = vpop.f32.mrf.mxu0
  %v399 = vadd.f32 %v316, %v398
  %v400 = vpop.f32.mrf.mxu0
  %401 = vmatprep.mubr.bf16.mxu0 0
  %402 = vmatmul.mubr.bf16.gmra.mxu0 %v347
  %v403 = vpop.f32.mrf.mxu0
  %v404 = vadd.f32 %v316, %v403
  %v405 = vpop.f32.mrf.mxu0
  %v406 = vpop.f32.mrf.mxu0
  %v407 = vadd.f32 %v316, %v406
  %v408 = vpop.f32.mrf.mxu0
  %409 = vmatprep.mubr.bf16.mxu0 0
  %410 = vmatmul.mubr.bf16.gmra.mxu0 %v350
  %v411 = vpop.f32.mrf.mxu0
  %v412 = vadd.f32 %v316, %v411
  %v413 = vpop.f32.mrf.mxu0
  %v414 = vpop.f32.mrf.mxu0
  %v415 = vadd.f32 %v316, %v414
  %v416 = vpop.f32.mrf.mxu0
  %417 = vmatprep.mubr.bf16.mxu0 0
  %418 = vmatmul.mubr.bf16.gmra.mxu0 %v353
  %v419 = vpop.f32.mrf.mxu0
  %v420 = vadd.f32 %v316, %v419
  %v421 = vpop.f32.mrf.mxu0
  %v422 = vpop.f32.mrf.mxu0
  %v423 = vadd.f32 %v316, %v422
  %v424 = vpop.f32.mrf.mxu0
  %425 = vmatprep.mubr.bf16.mxu0 0
  %426 = vmatmul.mubr.bf16.gmra.mxu0 %v356
  %v427 = vpop.f32.mrf.mxu0
  %v428 = vadd.f32 %v316, %v427
  %v429 = vpop.f32.mrf.mxu0
  %v430 = vpop.f32.mrf.mxu0
  %v431 = vadd.f32 %v316, %v430
  %v432 = vpop.f32.mrf.mxu0
  %433 = vmatprep.mubr.bf16.mxu0 0
  %434 = vmatmul.mubr.bf16.gmra.mxu0 %v359
  %v435 = vpop.f32.mrf.mxu0
  %v436 = vadd.f32 %v316, %v435
  %v437 = vpop.f32.mrf.mxu0
  %v438 = vpop.f32.mrf.mxu0
  %v439 = vadd.f32 %v316, %v438
  %v440 = vpop.f32.mrf.mxu0
  %441 = vdwg.mxu0
  %s442 = smul.u32 0, 96
  %v443 = vlaneseq
  %v444 = vshrl.u32 %v443, 7
  %v445 = vadd.s32 %v444, 8
  %v446 = vadd.s32 %v444, 16
  %v447 = vadd.s32 %v444, 24
  %v448 = vadd.s32 %v444, 32
  %v449 = vadd.s32 %v444, 40
  %v450 = vadd.s32 %v444, 48
  %v451 = vadd.s32 %v444, 56
  %v452 = vadd.s32 %v444, 64
  %v453 = vadd.s32 %v444, 72
  %v454 = vadd.s32 %v444, 80
  %v455 = vadd.s32 %v444, 88
  %v456 = vstv %s442
  %v457 = vadd.s32 %v456, %v444
  %v458 = vadd.s32 %v456, %v445
  %v459 = vadd.s32 %v456, %v446
  %v460 = vadd.s32 %v456, %v447
  %v461 = vadd.s32 %v456, %v448
  %v462 = vadd.s32 %v456, %v449
  %v463 = vadd.s32 %v456, %v450
  %v464 = vadd.s32 %v456, %v451
  %v465 = vadd.s32 %v456, %v452
  %v466 = vadd.s32 %v456, %v453
  %v467 = vadd.s32 %v456, %v454
  %v468 = vadd.s32 %v456, %v455
  %vm469 = vcmp.lt.s32.totalorder %v457, 95
  %vm470 = vcmp.lt.s32.totalorder %v458, 95
  %vm471 = vcmp.lt.s32.totalorder %v459, 95
  %vm472 = vcmp.lt.s32.totalorder %v460, 95
  %vm473 = vcmp.lt.s32.totalorder %v461, 95
  %vm474 = vcmp.lt.s32.totalorder %v462, 95
  %vm475 = vcmp.lt.s32.totalorder %v463, 95
  %vm476 = vcmp.lt.s32.totalorder %v464, 95
  %vm477 = vcmp.lt.s32.totalorder %v465, 95
  %vm478 = vcmp.lt.s32.totalorder %v466, 95
  %vm479 = vcmp.lt.s32.totalorder %v467, 95
  %vm480 = vcmp.lt.s32.totalorder %v468, 95
  %v481 = vsel %vm469, 1, 0
  %v482 = vsel %vm470, 1, 0
  %v483 = vsel %vm471, 1, 0
  %v484 = vsel %vm472, 1, 0
  %v485 = vsel %vm473, 1, 0
  %v486 = vsel %vm474, 1, 0
  %v487 = vsel %vm475, 1, 0
  %v488 = vsel %vm476, 1, 0
  %v489 = vsel %vm477, 1, 0
  %v490 = vsel %vm478, 1, 0
  %v491 = vsel %vm479, 1, 0
  %v492 = vsel %vm480, 1, 0
  %v493 = vcvt.s32.f32 %v481
  %v494 = vcvt.s32.f32 %v482
  %v495 = vcvt.s32.f32 %v483
  %v496 = vcvt.s32.f32 %v484
  %v497 = vcvt.s32.f32 %v485
  %v498 = vcvt.s32.f32 %v486
  %v499 = vcvt.s32.f32 %v487
  %v500 = vcvt.s32.f32 %v488
  %v501 = vcvt.s32.f32 %v489
  %v502 = vcvt.s32.f32 %v490
  %v503 = vcvt.s32.f32 %v491
  %v504 = vcvt.s32.f32 %v492
  %v505 = vmul.f32 %v396, %v493
  %v506 = vmul.f32 %v399, %v494
  %v507 = vmul.f32 %v404, %v495
  %v508 = vmul.f32 %v407, %v496
  %v509 = vmul.f32 %v412, %v497
  %v510 = vmul.f32 %v415, %v498
  %v511 = vmul.f32 %v420, %v499
  %v512 = vmul.f32 %v423, %v500
  %v513 = vmul.f32 %v428, %v501
  %v514 = vmul.f32 %v431, %v502
  %v515 = vmul.f32 %v436, %v503
  %v516 = vmul.f32 %v439, %v504
  %v517 = vadd.f32 %v505, %v506
  %v518 = vadd.f32 %v517, %v507
  %v519 = vadd.f32 %v518, %v508
  %v520 = vadd.f32 %v519, %v509
  %v521 = vadd.f32 %v520, %v510
  %v522 = vadd.f32 %v521, %v511
  %v523 = vadd.f32 %v522, %v512
  %v524 = vadd.f32 %v523, %v513
  %v525 = vadd.f32 %v524, %v514
  %v526 = vadd.f32 %v525, %v515
  %v527 = vadd.f32 %v526, %v516
  %v528 = vrot.slane %v527, 4
  %v529 = vadd.f32 %v527, %v528
  %v530 = vrot.slane %v529, 2
  %v531 = vadd.f32 %v529, %v530
  %v532 = vrot.slane %v531, 1
  %v533 = vadd.f32 %v531, %v532
  %v534 = vmul.f32 %v505, %v505
  %v535 = vmul.f32 %v506, %v506
  %v536 = vmul.f32 %v507, %v507
  %v537 = vmul.f32 %v508, %v508
  %v538 = vmul.f32 %v509, %v509
  %v539 = vmul.f32 %v510, %v510
  %v540 = vmul.f32 %v511, %v511
  %v541 = vmul.f32 %v512, %v512
  %v542 = vmul.f32 %v513, %v513
  %v543 = vmul.f32 %v514, %v514
  %v544 = vmul.f32 %v515, %v515
  %v545 = vmul.f32 %v516, %v516
  %v546 = vadd.f32 %v534, %v535
  %v547 = vadd.f32 %v546, %v536
  %v548 = vadd.f32 %v547, %v537
  %v549 = vadd.f32 %v548, %v538
  %v550 = vadd.f32 %v549, %v539
  %v551 = vadd.f32 %v550, %v540
  %v552 = vadd.f32 %v551, %v541
  %v553 = vadd.f32 %v552, %v542
  %v554 = vadd.f32 %v553, %v543
  %v555 = vadd.f32 %v554, %v544
  %v556 = vadd.f32 %v555, %v545
  %v557 = vrot.slane %v556, 4
  %v558 = vadd.f32 %v556, %v557
  %v559 = vrot.slane %v558, 2
  %v560 = vadd.f32 %v558, %v559
  %v561 = vrot.slane %v560, 1
  %v562 = vadd.f32 %v560, %v561
  %vm563 = vcmask 1040384
  %v564 = vsel %vm563, %v533, %v562
  %565 = vst [vmem:[%s6] sm:$0x3] %v564
  %v566 = vpack.c.bf16 %v506, %v505
  %v567 = vpack.c.bf16 %v508, %v507
  %v568 = vpack.c.bf16 %v510, %v509
  %v569 = vpack.c.bf16 %v512, %v511
  %v570 = vpack.c.bf16 %v514, %v513
  %v571 = vpack.c.bf16 %v516, %v515
  %v578 = vunpack.c.l.b16 %v566
  %v579 = vunpack.c.h.b16 %v566
  %v580 = vunpack.c.l.b16 %v567
  %v581 = vunpack.c.h.b16 %v567
  %v582 = vunpack.c.l.b16 %v568
  %v583 = vunpack.c.h.b16 %v568
  %v584 = vunpack.c.l.b16 %v569
  %v585 = vunpack.c.h.b16 %v569
  %v586 = vunpack.c.l.b16 %v570
  %v587 = vunpack.c.h.b16 %v570
  %v588 = vunpack.c.l.b16 %v571
  %v589 = vunpack.c.h.b16 %v571
  %v590 = vpack.c.b16 %v578, %v578
  %v591 = vpack.c.b16 %v579, %v579
  %v592 = vpack.c.b16 %v580, %v580
  %v593 = vpack.c.b16 %v581, %v581
  %v594 = vpack.c.b16 %v582, %v582
  %v595 = vpack.c.b16 %v583, %v583
  %v596 = vpack.c.b16 %v584, %v584
  %v597 = vpack.c.b16 %v585, %v585
  %v598 = vpack.c.b16 %v586, %v586
  %v599 = vpack.c.b16 %v587, %v587
  %v600 = vpack.c.b16 %v588, %v588
  %v601 = vpack.c.b16 %v589, %v589
  %614 = vst [vmem:[%s5] sm:$0xf] %v590
  %615 = vst [vmem:[%s5 + $0x4] sm:$0xf] %v591
  %616 = vst [vmem:[%s5 + $0x8] sm:$0xf] %v592
  %617 = vst [vmem:[%s5 + $0xc] sm:$0xf] %v593
  %618 = vst [vmem:[%s5 + $0x10] sm:$0xf] %v594
  %619 = vst [vmem:[%s5 + $0x14] sm:$0xf] %v595
  %620 = vst [vmem:[%s5 + $0x18] sm:$0xf] %v596
  %621 = vst [vmem:[%s5 + $0x1c] sm:$0xf] %v597
  %622 = vst [vmem:[%s5 + $0x20] sm:$0xf] %v598
  %623 = vst [vmem:[%s5 + $0x24] sm:$0xf] %v599
  %624 = vst [vmem:[%s5 + $0x28] sm:$0xf] %v600
  %625 = vst [vmem:[%s5 + $0x2c] sm:$0xf] %v601
  // Predicated region
  $region22: #{_ppmodel_forward.3} parent=0 // pred_check
    _
  $region23: #{_ppmodel_forward.3} parent=0 // pred_check_branch
    %627 = sbr.rel (0) target = $region25
  $region24: #{_ppmodel_forward.3} parent=0 // pred_region
    _
  $region25: #{_ppmodel_forward.3} parent=0 // pred_fallthru
    _
  // Predicated region
  $region26: #{_ppmodel_forward.3} parent=0 // pred_check
    _
  $region27: #{_ppmodel_forward.3} parent=0 // pred_check_branch
    %629 = sbr.rel (0) target = $region29
  $region28: #{_ppmodel_forward.3} parent=0 // pred_region
    _
  $region29: #{_ppmodel_forward.3} parent=0 // pred_fallthru
    _
  // Predicated region
  $region30: #{_ppmodel_forward.3} parent=0 // pred_check
    _
  $region31: #{_ppmodel_forward.3} parent=0 // pred_check_branch
    %631 = sbr.rel (0) target = $region33
  $region32: #{_ppmodel_forward.3} parent=0 // pred_region
    _
  $region33: #{_ppmodel_forward.3} parent=0 // pred_fallthru
    _
  // Predicated region
  $region34: #{_ppmodel_forward.3} parent=0 // pred_check
    _
  $region35: #{_ppmodel_forward.3} parent=0 // pred_check_branch
    %633 = sbr.rel (0) target = $region37
  $region36: #{_ppmodel_forward.3} parent=0 // pred_region
    _
  $region37: #{_ppmodel_forward.3} parent=0 // pred_fallthru
    _

// kernel: _ppmodel_forward.5
$region0: #{_ppmodel_forward.5}
  #allocation0 [shape = 'u32[]', space=smem, size = 0x4, offset = 0x4, fixed_abs, tag = 'smem constant byte address 0x4 - core index']
  #allocation1 [shape = 'u32[144,128]{1,0:T(1,128)}', space=vmem, size = 0x12000, scoped, tag = 'internal scratch']
  %s0 = inlined_call_operand.vmem [shape: f32[1,256], index: 0, kind: input, shape index: {}]
  %s1 = inlined_call_operand.vmem [shape: f32[1,256], index: 1, kind: input, shape index: {}]
  %s2 = inlined_call_operand.vmem [shape: bf16[256,64], index: 2, kind: input, shape index: {}]
  %s3 = inlined_call_operand.vmem [shape: f32[1,64], index: 3, kind: input, shape index: {}]
  %s4 = inlined_call_operand.vmem [shape: bf16[64,16], index: 4, kind: input, shape index: {}]
  %s5 = inlined_call_operand.vmem [shape: f32[1,16], index: 5, kind: input, shape index: {}]
  %s6 = inlined_call_operand.vmem [shape: bf16[96,256], index: 6, kind: input, shape index: {}]
  %s7 = inlined_call_operand.vmem [shape: f32[96,16], index: 7, kind: output, shape index: {}]
  %s8 = sld [smem:[#allocation0]]
  $region38: #{_ppmodel_forward.5} parent=0
    _
  %s10 = ssub.s32 1, %s8
  %s11 = scalar_select 0, %s10, %s8
  // Predicated region
  $region2: #{_ppmodel_forward.5} parent=0 // pred_check
    _
  $region3: #{_ppmodel_forward.5} parent=0 // pred_check_branch
    %13 = sbr.rel (0) target = $region5
  $region4: #{_ppmodel_forward.5} parent=0 // pred_region
    _
  $region5: #{_ppmodel_forward.5} parent=0 // pred_fallthru
    _
  // Predicated region
  $region6: #{_ppmodel_forward.5} parent=0 // pred_check
    _
  $region7: #{_ppmodel_forward.5} parent=0 // pred_check_branch
    %15 = sbr.rel (0) target = $region9
  $region8: #{_ppmodel_forward.5} parent=0 // pred_region
    _
  $region9: #{_ppmodel_forward.5} parent=0 // pred_fallthru
    _
  // Predicated region
  $region10: #{_ppmodel_forward.5} parent=0 // pred_check
    _
  $region11: #{_ppmodel_forward.5} parent=0 // pred_check_branch
    %17 = sbr.rel (0) target = $region13
  $region12: #{_ppmodel_forward.5} parent=0 // pred_region
    _
  $region13: #{_ppmodel_forward.5} parent=0 // pred_fallthru
    _
  // Predicated region
  $region14: #{_ppmodel_forward.5} parent=0 // pred_check
    _
  $region15: #{_ppmodel_forward.5} parent=0 // pred_check_branch
    %19 = sbr.rel (0) target = $region17
  $region16: #{_ppmodel_forward.5} parent=0 // pred_region
    _
  $region17: #{_ppmodel_forward.5} parent=0 // pred_fallthru
    _
  // Predicated region
  $region18: #{_ppmodel_forward.5} parent=0 // pred_check
    _
  $region19: #{_ppmodel_forward.5} parent=0 // pred_check_branch
    %21 = sbr.rel (0) target = $region21
  $region20: #{_ppmodel_forward.5} parent=0 // pred_region
    _
  $region21: #{_ppmodel_forward.5} parent=0 // pred_fallthru
    _
  // Predicated region
  $region22: #{_ppmodel_forward.5} parent=0 // pred_check
    _
  $region23: #{_ppmodel_forward.5} parent=0 // pred_check_branch
    %23 = sbr.rel (0) target = $region25
  $region24: #{_ppmodel_forward.5} parent=0 // pred_region
    _
  $region25: #{_ppmodel_forward.5} parent=0 // pred_fallthru
    _
  // Predicated region
  $region26: #{_ppmodel_forward.5} parent=0 // pred_check
    _
  $region27: #{_ppmodel_forward.5} parent=0 // pred_check_branch
    %25 = sbr.rel (0) target = $region29
  $region28: #{_ppmodel_forward.5} parent=0 // pred_region
    _
  $region29: #{_ppmodel_forward.5} parent=0 // pred_fallthru
    _
  %v27 = vld [vmem:[%s6] sm:$0xff]
  %v28 = vld [vmem:[%s6 + $0x8] sm:$0xff]
  %v29 = vld [vmem:[%s6 + $0x10] sm:$0xff]
  %v30 = vld [vmem:[%s6 + $0x18] sm:$0xff]
  %v31 = vld [vmem:[%s6 + $0x20] sm:$0xff]
  %v32 = vld [vmem:[%s6 + $0x28] sm:$0xff]
  %v33 = vld [vmem:[%s6 + $0x30] sm:$0xff]
  %v34 = vld [vmem:[%s6 + $0x38] sm:$0xff]
  %v35 = vld [vmem:[%s6 + $0x40] sm:$0xff]
  %v36 = vld [vmem:[%s6 + $0x48] sm:$0xff]
  %v37 = vld [vmem:[%s6 + $0x50] sm:$0xff]
  %v38 = vld [vmem:[%s6 + $0x58] sm:$0xff]
  %v39 = vunpack.c.l.bf16 %v27
  %v40 = vunpack.c.h.bf16 %v27
  %v41 = vunpack.c.l.bf16 %v28
  %v42 = vunpack.c.h.bf16 %v28
  %v43 = vunpack.c.l.bf16 %v29
  %v44 = vunpack.c.h.bf16 %v29
  %v45 = vunpack.c.l.bf16 %v30
  %v46 = vunpack.c.h.bf16 %v30
  %v47 = vunpack.c.l.bf16 %v31
  %v48 = vunpack.c.h.bf16 %v31
  %v49 = vunpack.c.l.bf16 %v32
  %v50 = vunpack.c.h.bf16 %v32
  %v51 = vunpack.c.l.bf16 %v33
  %v52 = vunpack.c.h.bf16 %v33
  %v53 = vunpack.c.l.bf16 %v34
  %v54 = vunpack.c.h.bf16 %v34
  %v55 = vunpack.c.l.bf16 %v35
  %v56 = vunpack.c.h.bf16 %v35
  %v57 = vunpack.c.l.bf16 %v36
  %v58 = vunpack.c.h.bf16 %v36
  %v59 = vunpack.c.l.bf16 %v37
  %v60 = vunpack.c.h.bf16 %v37
  %v61 = vunpack.c.l.bf16 %v38
  %v62 = vunpack.c.h.bf16 %v38
  %v63 = vld [vmem:[%s0] sm:$0x3]
  %v65 = vlaneseq
  %v66 = vshrl.u32 %v65, 7
  %v67 = vsub.s32 0, %v66
  %v68 = vrot.slane %v63, %v67
  %v69 = vlaneseq
  %v70 = vshrl.u32 %v69, 7
  %v71 = vsub.s32 1, %v70
  %v72 = vrot.slane %v63, %v71
  %v75 = vmul.f32 %v39, %v68
  %v76 = vmul.f32 %v40, %v72
  %v77 = vmul.f32 %v41, %v68
  %v78 = vmul.f32 %v42, %v72
  %v79 = vmul.f32 %v43, %v68
  %v80 = vmul.f32 %v44, %v72
  %v81 = vmul.f32 %v45, %v68
  %v82 = vmul.f32 %v46, %v72
  %v83 = vmul.f32 %v47, %v68
  %v84 = vmul.f32 %v48, %v72
  %v85 = vmul.f32 %v49, %v68
  %v86 = vmul.f32 %v50, %v72
  %v87 = vmul.f32 %v51, %v68
  %v88 = vmul.f32 %v52, %v72
  %v89 = vmul.f32 %v53, %v68
  %v90 = vmul.f32 %v54, %v72
  %v91 = vmul.f32 %v55, %v68
  %v92 = vmul.f32 %v56, %v72
  %v93 = vmul.f32 %v57, %v68
  %v94 = vmul.f32 %v58, %v72
  %v95 = vmul.f32 %v59, %v68
  %v96 = vmul.f32 %v60, %v72
  %v97 = vmul.f32 %v61, %v68
  %v98 = vmul.f32 %v62, %v72
  %v99 = vld [vmem:[%s1] sm:$0x3]
  %v101 = vlaneseq
  %v102 = vshrl.u32 %v101, 7
  %v103 = vsub.s32 0, %v102
  %v104 = vrot.slane %v99, %v103
  %v105 = vlaneseq
  %v106 = vshrl.u32 %v105, 7
  %v107 = vsub.s32 1, %v106
  %v108 = vrot.slane %v99, %v107
  %v111 = vadd.f32 %v75, %v104
  %v112 = vadd.f32 %v76, %v108
  %v113 = vadd.f32 %v77, %v104
  %v114 = vadd.f32 %v78, %v108
  %v115 = vadd.f32 %v79, %v104
  %v116 = vadd.f32 %v80, %v108
  %v117 = vadd.f32 %v81, %v104
  %v118 = vadd.f32 %v82, %v108
  %v119 = vadd.f32 %v83, %v104
  %v120 = vadd.f32 %v84, %v108
  %v121 = vadd.f32 %v85, %v104
  %v122 = vadd.f32 %v86, %v108
  %v123 = vadd.f32 %v87, %v104
  %v124 = vadd.f32 %v88, %v108
  %v125 = vadd.f32 %v89, %v104
  %v126 = vadd.f32 %v90, %v108
  %v127 = vadd.f32 %v91, %v104
  %v128 = vadd.f32 %v92, %v108
  %v129 = vadd.f32 %v93, %v104
  %v130 = vadd.f32 %v94, %v108
  %v131 = vadd.f32 %v95, %v104
  %v132 = vadd.f32 %v96, %v108
  %v133 = vadd.f32 %v97, %v104
  %v134 = vadd.f32 %v98, %v108
  %v135 = vmax.f32 %v111, 0.0
  %v136 = vmax.f32 %v112, 0.0
  %v137 = vmax.f32 %v113, 0.0
  %v138 = vmax.f32 %v114, 0.0
  %v139 = vmax.f32 %v115, 0.0
  %v140 = vmax.f32 %v116, 0.0
  %v141 = vmax.f32 %v117, 0.0
  %v142 = vmax.f32 %v118, 0.0
  %v143 = vmax.f32 %v119, 0.0
  %v144 = vmax.f32 %v120, 0.0
  %v145 = vmax.f32 %v121, 0.0
  %v146 = vmax.f32 %v122, 0.0
  %v147 = vmax.f32 %v123, 0.0
  %v148 = vmax.f32 %v124, 0.0
  %v149 = vmax.f32 %v125, 0.0
  %v150 = vmax.f32 %v126, 0.0
  %v151 = vmax.f32 %v127, 0.0
  %v152 = vmax.f32 %v128, 0.0
  %v153 = vmax.f32 %v129, 0.0
  %v154 = vmax.f32 %v130, 0.0
  %v155 = vmax.f32 %v131, 0.0
  %v156 = vmax.f32 %v132, 0.0
  %v157 = vmax.f32 %v133, 0.0
  %v158 = vmax.f32 %v134, 0.0
  %v159 = vpack.c.bf16 %v137, %v135
  %v160 = vpack.c.bf16 %v138, %v136
  %v161 = vpack.c.bf16 %v141, %v139
  %v162 = vpack.c.bf16 %v142, %v140
  %v163 = vpack.c.bf16 %v145, %v143
  %v164 = vpack.c.bf16 %v146, %v144
  %v165 = vpack.c.bf16 %v149, %v147
  %v166 = vpack.c.bf16 %v150, %v148
  %v167 = vpack.c.bf16 %v153, %v151
  %v168 = vpack.c.bf16 %v154, %v152
  %v169 = vpack.c.bf16 %v157, %v155
  %v170 = vpack.c.bf16 %v158, %v156
  %v171 = vld [vmem:[%s2] sm:$0xf]
  %v172 = vld [vmem:[%s2 + $0x4] sm:$0xf]
  %v173 = vld [vmem:[%s2 + $0x8] sm:$0xf]
  %v174 = vld [vmem:[%s2 + $0xc] sm:$0xf]
  %v175 = vld [vmem:[%s2 + $0x10] sm:$0xf]
  %v176 = vld [vmem:[%s2 + $0x14] sm:$0xf]
  %v177 = vld [vmem:[%s2 + $0x18] sm:$0xf]
  %v178 = vld [vmem:[%s2 + $0x1c] sm:$0xf]
  %v179 = vld [vmem:[%s2 + $0x20] sm:$0xf]
  %v180 = vld [vmem:[%s2 + $0x24] sm:$0xf]
  %v181 = vld [vmem:[%s2 + $0x28] sm:$0xf]
  %v182 = vld [vmem:[%s2 + $0x2c] sm:$0xf]
  %v183 = vld [vmem:[%s2 + $0x30] sm:$0xf]
  %v184 = vld [vmem:[%s2 + $0x34] sm:$0xf]
  %v185 = vld [vmem:[%s2 + $0x38] sm:$0xf]
  %v186 = vld [vmem:[%s2 + $0x3c] sm:$0xf]
  %v187 = vld [vmem:[%s2 + $0x40] sm:$0xf]
  %v188 = vld [vmem:[%s2 + $0x44] sm:$0xf]
  %v189 = vld [vmem:[%s2 + $0x48] sm:$0xf]
  %v190 = vld [vmem:[%s2 + $0x4c] sm:$0xf]
  %v191 = vld [vmem:[%s2 + $0x50] sm:$0xf]
  %v192 = vld [vmem:[%s2 + $0x54] sm:$0xf]
  %v193 = vld [vmem:[%s2 + $0x58] sm:$0xf]
  %v194 = vld [vmem:[%s2 + $0x5c] sm:$0xf]
  %v195 = vld [vmem:[%s2 + $0x60] sm:$0xf]
  %v196 = vld [vmem:[%s2 + $0x64] sm:$0xf]
  %v197 = vld [vmem:[%s2 + $0x68] sm:$0xf]
  %v198 = vld [vmem:[%s2 + $0x6c] sm:$0xf]
  %v199 = vld [vmem:[%s2 + $0x70] sm:$0xf]
  %v200 = vld [vmem:[%s2 + $0x74] sm:$0xf]
  %v201 = vld [vmem:[%s2 + $0x78] sm:$0xf]
  %v202 = vld [vmem:[%s2 + $0x7c] sm:$0xf]
  %v203 = vld [vmem:[%s3] sm:$0x1]
  %v205 = vlaneseq
  %v206 = vshrl.u32 %v205, 7
  %v207 = vsub.s32 0, %v206
  %v208 = vrot.slane %v203, %v207
  %v242 = vunpack.c.l.b16 %v171
  %v243 = vunpack.c.l.b16 %v172
  %v244 = vunpack.c.l.b16 %v173
  %v245 = vunpack.c.l.b16 %v174
  %v246 = vunpack.c.l.b16 %v175
  %v247 = vunpack.c.l.b16 %v176
  %v248 = vunpack.c.l.b16 %v177
  %v249 = vunpack.c.l.b16 %v178
  %v250 = vunpack.c.l.b16 %v179
  %v251 = vunpack.c.l.b16 %v180
  %v252 = vunpack.c.l.b16 %v181
  %v253 = vunpack.c.l.b16 %v182
  %v254 = vunpack.c.l.b16 %v183
  %v255 = vunpack.c.l.b16 %v184
  %v256 = vunpack.c.l.b16 %v185
  %v257 = vunpack.c.l.b16 %v186
  %v258 = vunpack.c.l.b16 %v187
  %v259 = vunpack.c.l.b16 %v188
  %v260 = vunpack.c.l.b16 %v189
  %v261 = vunpack.c.l.b16 %v190
  %v262 = vunpack.c.l.b16 %v191
  %v263 = vunpack.c.l.b16 %v192
  %v264 = vunpack.c.l.b16 %v193
  %v265 = vunpack.c.l.b16 %v194
  %v266 = vunpack.c.l.b16 %v195
  %v267 = vunpack.c.l.b16 %v196
  %v268 = vunpack.c.l.b16 %v197
  %v269 = vunpack.c.l.b16 %v198
  %v270 = vunpack.c.l.b16 %v199
  %v271 = vunpack.c.l.b16 %v200
  %v272 = vunpack.c.l.b16 %v201
  %v273 = vunpack.c.l.b16 %v202
  %v274 = vpack.c.b16 %v243, %v242
  %v275 = vpack.c.b16 %v245, %v244
  %v276 = vpack.c.b16 %v247, %v246
  %v277 = vpack.c.b16 %v249, %v248
  %v278 = vpack.c.b16 %v251, %v250
  %v279 = vpack.c.b16 %v253, %v252
  %v280 = vpack.c.b16 %v255, %v254
  %v281 = vpack.c.b16 %v257, %v256
  %v282 = vpack.c.b16 %v259, %v258
  %v283 = vpack.c.b16 %v261, %v260
  %v284 = vpack.c.b16 %v263, %v262
  %v285 = vpack.c.b16 %v265, %v264
  %v286 = vpack.c.b16 %v267, %v266
  %v287 = vpack.c.b16 %v269, %v268
  %v288 = vpack.c.b16 %v271, %v270
  %v289 = vpack.c.b16 %v273, %v272
  %306 = vmatprep.subr.bf16.mxu0 0
  %307 = vmatpush1.bf16.msra.mxu0 %v281
  %308 = vmatprep.subr.bf16.mxu0 0
  %309 = vmatpush1.bf16.msra.mxu0 %v280
  %310 = vmatprep.subr.bf16.mxu0 0
  %311 = vmatpush1.bf16.msra.mxu0 %v279
  %312 = vmatprep.subr.bf16.mxu0 0
  %313 = vmatpush1.bf16.msra.mxu0 %v278
  %314 = vmatprep.subr.bf16.mxu0 0
  %315 = vmatpush1.bf16.msra.mxu0 %v277
  %316 = vmatprep.subr.bf16.mxu0 0
  %317 = vmatpush1.bf16.msra.mxu0 %v276
  %318 = vmatprep.subr.bf16.mxu0 0
  %319 = vmatpush1.bf16.msra.mxu0 %v275
  %320 = vmatprep.subr.bf16.mxu0 0
  %321 = vmatpush1.bf16.msra.mxu0 %v274
  %322 = vmatprep.subr.bf16.mxu0 0
  %323 = vmatpush2.bf16.msra.mxu0 %v289
  %324 = vmatprep.subr.bf16.mxu0 0
  %325 = vmatpush2.bf16.msra.mxu0 %v288
  %326 = vmatprep.subr.bf16.mxu0 0
  %327 = vmatpush2.bf16.msra.mxu0 %v287
  %328 = vmatprep.subr.bf16.mxu0 0
  %329 = vmatpush2.bf16.msra.mxu0 %v286
  %330 = vmatprep.subr.bf16.mxu0 0
  %331 = vmatpush2.bf16.msra.mxu0 %v285
  %332 = vmatprep.subr.bf16.mxu0 0
  %333 = vmatpush2.bf16.msra.mxu0 %v284
  %334 = vmatprep.subr.bf16.mxu0 0
  %335 = vmatpush2.bf16.msra.mxu0 %v283
  %336 = vmatprep.subr.bf16.mxu0 0
  %337 = vmatpush2.bf16.msra.mxu0 %v282
  %338 = vmatprep.mubr.bf16.mxu0 %v160
  %339 = vmatmul.mubr.bf16.gmra.mxu0 %v159
  %v340 = vpop.f32.mrf.mxu0
  %v341 = vadd.f32 %v208, %v340
  %v342 = vpop.f32.mrf.mxu0
  %v343 = vpop.f32.mrf.mxu0
  %v344 = vadd.f32 %v208, %v343
  %v345 = vpop.f32.mrf.mxu0
  %346 = vmatprep.mubr.bf16.mxu0 %v162
  %347 = vmatmul.mubr.bf16.gmra.mxu0 %v161
  %v348 = vpop.f32.mrf.mxu0
  %v349 = vadd.f32 %v208, %v348
  %v350 = vpop.f32.mrf.mxu0
  %v351 = vpop.f32.mrf.mxu0
  %v352 = vadd.f32 %v208, %v351
  %v353 = vpop.f32.mrf.mxu0
  %354 = vmatprep.mubr.bf16.mxu0 %v164
  %355 = vmatmul.mubr.bf16.gmra.mxu0 %v163
  %v356 = vpop.f32.mrf.mxu0
  %v357 = vadd.f32 %v208, %v356
  %v358 = vpop.f32.mrf.mxu0
  %v359 = vpop.f32.mrf.mxu0
  %v360 = vadd.f32 %v208, %v359
  %v361 = vpop.f32.mrf.mxu0
  %362 = vmatprep.mubr.bf16.mxu0 %v166
  %363 = vmatmul.mubr.bf16.gmra.mxu0 %v165
  %v364 = vpop.f32.mrf.mxu0
  %v365 = vadd.f32 %v208, %v364
  %v366 = vpop.f32.mrf.mxu0
  %v367 = vpop.f32.mrf.mxu0
  %v368 = vadd.f32 %v208, %v367
  %v369 = vpop.f32.mrf.mxu0
  %370 = vmatprep.mubr.bf16.mxu0 %v168
  %371 = vmatmul.mubr.bf16.gmra.mxu0 %v167
  %v372 = vpop.f32.mrf.mxu0
  %v373 = vadd.f32 %v208, %v372
  %v374 = vpop.f32.mrf.mxu0
  %v375 = vpop.f32.mrf.mxu0
  %v376 = vadd.f32 %v208, %v375
  %v377 = vpop.f32.mrf.mxu0
  %378 = vmatprep.mubr.bf16.mxu0 %v170
  %379 = vmatmul.mubr.bf16.gmra.mxu0 %v169
  %v380 = vpop.f32.mrf.mxu0
  %v381 = vadd.f32 %v208, %v380
  %v382 = vpop.f32.mrf.mxu0
  %v383 = vpop.f32.mrf.mxu0
  %v384 = vadd.f32 %v208, %v383
  %v385 = vpop.f32.mrf.mxu0
  %386 = vdwg.mxu0
  %v387 = vpack.c.bf16 %v344, %v341
  %v388 = vpack.c.bf16 %v352, %v349
  %v389 = vpack.c.bf16 %v360, %v357
  %v390 = vpack.c.bf16 %v368, %v365
  %v391 = vpack.c.bf16 %v376, %v373
  %v392 = vpack.c.bf16 %v384, %v381
  %v393 = vld [vmem:[%s4] sm:$0xf]
  %v394 = vld [vmem:[%s4 + $0x4] sm:$0xf]
  %v395 = vld [vmem:[%s4 + $0x8] sm:$0xf]
  %v396 = vld [vmem:[%s4 + $0xc] sm:$0xf]
  %v397 = vld [vmem:[%s4 + $0x10] sm:$0xf]
  %v398 = vld [vmem:[%s4 + $0x14] sm:$0xf]
  %v399 = vld [vmem:[%s4 + $0x18] sm:$0xf]
  %v400 = vld [vmem:[%s4 + $0x1c] sm:$0xf]
  %v401 = vld [vmem:[%s5] sm:$0x1]
  %v403 = vlaneseq
  %v404 = vshrl.u32 %v403, 7
  %v405 = vsub.s32 0, %v404
  %v406 = vrot.slane %v401, %v405
  %v416 = vunpack.c.l.b16 %v393
  %v417 = vunpack.c.l.b16 %v394
  %v418 = vunpack.c.l.b16 %v395
  %v419 = vunpack.c.l.b16 %v396
  %v420 = vunpack.c.l.b16 %v397
  %v421 = vunpack.c.l.b16 %v398
  %v422 = vunpack.c.l.b16 %v399
  %v423 = vunpack.c.l.b16 %v400
  %v424 = vpack.c.b16 %v417, %v416
  %v425 = vpack.c.b16 %v419, %v418
  %v426 = vpack.c.b16 %v421, %v420
  %v427 = vpack.c.b16 %v423, %v422
  %vm432 = vcmask 523264
  %v434 = vsel %vm432, %v387, 0
  %v437 = vsel %vm432, %v388, 0
  %v440 = vsel %vm432, %v389, 0
  %v443 = vsel %vm432, %v390, 0
  %v446 = vsel %vm432, %v391, 0
  %v449 = vsel %vm432, %v392, 0
  %451 = vmatprep.subr.bf16.mxu0 0
  %452 = vmatpush1.bf16.msra.mxu0 0
  %453 = vmatprep.subr.bf16.mxu0 0
  %454 = vmatpush1.bf16.msra.mxu0 0
  %455 = vmatprep.subr.bf16.mxu0 0
  %456 = vmatpush1.bf16.msra.mxu0 0
  %457 = vmatprep.subr.bf16.mxu0 0
  %458 = vmatpush1.bf16.msra.mxu0 0
  %459 = vmatprep.subr.bf16.mxu0 0
  %460 = vmatpush1.bf16.msra.mxu0 %v427
  %461 = vmatprep.subr.bf16.mxu0 0
  %462 = vmatpush1.bf16.msra.mxu0 %v426
  %463 = vmatprep.subr.bf16.mxu0 0
  %464 = vmatpush1.bf16.msra.mxu0 %v425
  %465 = vmatprep.subr.bf16.mxu0 0
  %466 = vmatpush1.bf16.msra.mxu0 %v424
  %467 = vmatprep.subr.bf16.mxu0 0
  %468 = vmatpush2.bf16.msra.mxu0 0
  %469 = vmatprep.subr.bf16.mxu0 0
  %470 = vmatpush2.bf16.msra.mxu0 0
  %471 = vmatprep.subr.bf16.mxu0 0
  %472 = vmatpush2.bf16.msra.mxu0 0
  %473 = vmatprep.subr.bf16.mxu0 0
  %474 = vmatpush2.bf16.msra.mxu0 0
  %475 = vmatprep.subr.bf16.mxu0 0
  %476 = vmatpush2.bf16.msra.mxu0 0
  %477 = vmatprep.subr.bf16.mxu0 0
  %478 = vmatpush2.bf16.msra.mxu0 0
  %479 = vmatprep.subr.bf16.mxu0 0
  %480 = vmatpush2.bf16.msra.mxu0 0
  %481 = vmatprep.subr.bf16.mxu0 0
  %482 = vmatpush2.bf16.msra.mxu0 0
  %483 = vmatprep.mubr.bf16.mxu0 0
  %484 = vmatmul.mubr.bf16.gmra.mxu0 %v434
  %v485 = vpop.f32.mrf.mxu0
  %v486 = vadd.f32 %v406, %v485
  %v487 = vpop.f32.mrf.mxu0
  %v488 = vpop.f32.mrf.mxu0
  %v489 = vadd.f32 %v406, %v488
  %v490 = vpop.f32.mrf.mxu0
  %491 = vmatprep.mubr.bf16.mxu0 0
  %492 = vmatmul.mubr.bf16.gmra.mxu0 %v437
  %v493 = vpop.f32.mrf.mxu0
  %v494 = vadd.f32 %v406, %v493
  %v495 = vpop.f32.mrf.mxu0
  %v496 = vpop.f32.mrf.mxu0
  %v497 = vadd.f32 %v406, %v496
  %v498 = vpop.f32.mrf.mxu0
  %499 = vmatprep.mubr.bf16.mxu0 0
  %500 = vmatmul.mubr.bf16.gmra.mxu0 %v440
  %v501 = vpop.f32.mrf.mxu0
  %v502 = vadd.f32 %v406, %v501
  %v503 = vpop.f32.mrf.mxu0
  %v504 = vpop.f32.mrf.mxu0
  %v505 = vadd.f32 %v406, %v504
  %v506 = vpop.f32.mrf.mxu0
  %507 = vmatprep.mubr.bf16.mxu0 0
  %508 = vmatmul.mubr.bf16.gmra.mxu0 %v443
  %v509 = vpop.f32.mrf.mxu0
  %v510 = vadd.f32 %v406, %v509
  %v511 = vpop.f32.mrf.mxu0
  %v512 = vpop.f32.mrf.mxu0
  %v513 = vadd.f32 %v406, %v512
  %v514 = vpop.f32.mrf.mxu0
  %515 = vmatprep.mubr.bf16.mxu0 0
  %516 = vmatmul.mubr.bf16.gmra.mxu0 %v446
  %v517 = vpop.f32.mrf.mxu0
  %v518 = vadd.f32 %v406, %v517
  %v519 = vpop.f32.mrf.mxu0
  %v520 = vpop.f32.mrf.mxu0
  %v521 = vadd.f32 %v406, %v520
  %v522 = vpop.f32.mrf.mxu0
  %523 = vmatprep.mubr.bf16.mxu0 0
  %524 = vmatmul.mubr.bf16.gmra.mxu0 %v449
  %v525 = vpop.f32.mrf.mxu0
  %v526 = vadd.f32 %v406, %v525
  %v527 = vpop.f32.mrf.mxu0
  %v528 = vpop.f32.mrf.mxu0
  %v529 = vadd.f32 %v406, %v528
  %v530 = vpop.f32.mrf.mxu0
  %531 = vdwg.mxu0
  %v532 = vmax.f32 %v486, 0.0
  %v533 = vmax.f32 %v489, 0.0
  %v534 = vmax.f32 %v494, 0.0
  %v535 = vmax.f32 %v497, 0.0
  %v536 = vmax.f32 %v502, 0.0
  %v537 = vmax.f32 %v505, 0.0
  %v538 = vmax.f32 %v510, 0.0
  %v539 = vmax.f32 %v513, 0.0
  %v540 = vmax.f32 %v518, 0.0
  %v541 = vmax.f32 %v521, 0.0
  %v542 = vmax.f32 %v526, 0.0
  %v543 = vmax.f32 %v529, 0.0
  %vm544 = vcmask 130048
  %545 = vst.msk [vmem:[%s7] sm:$0xff] %vm544, %v532
  %546 = vst.msk [vmem:[%s7 + $0x8] sm:$0xff] %vm544, %v533
  %547 = vst.msk [vmem:[%s7 + $0x10] sm:$0xff] %vm544, %v534
  %548 = vst.msk [vmem:[%s7 + $0x18] sm:$0xff] %vm544, %v535
  %549 = vst.msk [vmem:[%s7 + $0x20] sm:$0xff] %vm544, %v536
  %550 = vst.msk [vmem:[%s7 + $0x28] sm:$0xff] %vm544, %v537
  %551 = vst.msk [vmem:[%s7 + $0x30] sm:$0xff] %vm544, %v538
  %552 = vst.msk [vmem:[%s7 + $0x38] sm:$0xff] %vm544, %v539
  %553 = vst.msk [vmem:[%s7 + $0x40] sm:$0xff] %vm544, %v540
  %554 = vst.msk [vmem:[%s7 + $0x48] sm:$0xff] %vm544, %v541
  %555 = vst.msk [vmem:[%s7 + $0x50] sm:$0xff] %vm544, %v542
  %556 = vst.msk [vmem:[%s7 + $0x58] sm:$0xff] %vm544, %v543
  // Predicated region
  $region30: #{_ppmodel_forward.5} parent=0 // pred_check
    _
  $region31: #{_ppmodel_forward.5} parent=0 // pred_check_branch
    %558 = sbr.rel (0) target = $region33
  $region32: #{_ppmodel_forward.5} parent=0 // pred_region
    _
  $region33: #{_ppmodel_forward.5} parent=0 // pred_fallthru
    _
  // Predicated region
  $region34: #{_ppmodel_forward.5} parent=0 // pred_check
    _
  $region35: #{_ppmodel_forward.5} parent=0 // pred_check_branch
    %560 = sbr.rel (0) target = $region37
  $region36: #{_ppmodel_forward.5} parent=0 // pred_region
    _
  $region37: #{_ppmodel_forward.5} parent=0 // pred_fallthru
    _

// kernel: _ppmodel_forward.4
$region0: #{_ppmodel_forward.4}
  #allocation0 [shape = 'u32[]', space=smem, size = 0x4, offset = 0x4, fixed_abs, tag = 'smem constant byte address 0x4 - core index']
  #allocation1 [shape = 'u32[144,128]{1,0:T(1,128)}', space=vmem, size = 0x12000, scoped, tag = 'internal scratch']
  %s0 = inlined_call_operand.vmem [shape: f32[1,128], index: 0, kind: input, shape index: {}]
  %s1 = inlined_call_operand.vmem [shape: f32[1,128], index: 1, kind: input, shape index: {}]
  %s2 = inlined_call_operand.vmem [shape: bf16[128,256], index: 2, kind: input, shape index: {}]
  %s3 = inlined_call_operand.vmem [shape: f32[1,256], index: 3, kind: input, shape index: {}]
  %s4 = inlined_call_operand.vmem [shape: bf16[96,128], index: 4, kind: input, shape index: {}]
  %s5 = inlined_call_operand.vmem [shape: bf16[96,256], index: 5, kind: output, shape index: {0}]
  %s6 = inlined_call_operand.vmem [shape: f32[1,2,256], index: 6, kind: output, shape index: {1}]
  %7 = xla_tuple %s5, %s6
  %s8 = sld [smem:[#allocation0]]
  $region38: #{_ppmodel_forward.4} parent=0
    _
  %s10 = ssub.s32 1, %s8
  %s11 = scalar_select 0, %s10, %s8
  // Predicated region
  $region2: #{_ppmodel_forward.4} parent=0 // pred_check
    _
  $region3: #{_ppmodel_forward.4} parent=0 // pred_check_branch
    %13 = sbr.rel (0) target = $region5
  $region4: #{_ppmodel_forward.4} parent=0 // pred_region
    _
  $region5: #{_ppmodel_forward.4} parent=0 // pred_fallthru
    _
  // Predicated region
  $region6: #{_ppmodel_forward.4} parent=0 // pred_check
    _
  $region7: #{_ppmodel_forward.4} parent=0 // pred_check_branch
    %15 = sbr.rel (0) target = $region9
  $region8: #{_ppmodel_forward.4} parent=0 // pred_region
    _
  $region9: #{_ppmodel_forward.4} parent=0 // pred_fallthru
    _
  // Predicated region
  $region10: #{_ppmodel_forward.4} parent=0 // pred_check
    _
  $region11: #{_ppmodel_forward.4} parent=0 // pred_check_branch
    %17 = sbr.rel (0) target = $region13
  $region12: #{_ppmodel_forward.4} parent=0 // pred_region
    _
  $region13: #{_ppmodel_forward.4} parent=0 // pred_fallthru
    _
  // Predicated region
  $region14: #{_ppmodel_forward.4} parent=0 // pred_check
    _
  $region15: #{_ppmodel_forward.4} parent=0 // pred_check_branch
    %19 = sbr.rel (0) target = $region17
  $region16: #{_ppmodel_forward.4} parent=0 // pred_region
    _
  $region17: #{_ppmodel_forward.4} parent=0 // pred_fallthru
    _
  // Predicated region
  $region18: #{_ppmodel_forward.4} parent=0 // pred_check
    _
  $region19: #{_ppmodel_forward.4} parent=0 // pred_check_branch
    %21 = sbr.rel (0) target = $region21
  $region20: #{_ppmodel_forward.4} parent=0 // pred_region
    _
  $region21: #{_ppmodel_forward.4} parent=0 // pred_fallthru
    _
  %v23 = vld [vmem:[%s4] sm:$0xf]
  %v24 = vld [vmem:[%s4 + $0x4] sm:$0xf]
  %v25 = vld [vmem:[%s4 + $0x8] sm:$0xf]
  %v26 = vld [vmem:[%s4 + $0xc] sm:$0xf]
  %v27 = vld [vmem:[%s4 + $0x10] sm:$0xf]
  %v28 = vld [vmem:[%s4 + $0x14] sm:$0xf]
  %v29 = vld [vmem:[%s4 + $0x18] sm:$0xf]
  %v30 = vld [vmem:[%s4 + $0x1c] sm:$0xf]
  %v31 = vld [vmem:[%s4 + $0x20] sm:$0xf]
  %v32 = vld [vmem:[%s4 + $0x24] sm:$0xf]
  %v33 = vld [vmem:[%s4 + $0x28] sm:$0xf]
  %v34 = vld [vmem:[%s4 + $0x2c] sm:$0xf]
  %v35 = vunpack.c.l.bf16 %v23
  %v36 = vunpack.c.l.bf16 %v24
  %v37 = vunpack.c.l.bf16 %v25
  %v38 = vunpack.c.l.bf16 %v26
  %v39 = vunpack.c.l.bf16 %v27
  %v40 = vunpack.c.l.bf16 %v28
  %v41 = vunpack.c.l.bf16 %v29
  %v42 = vunpack.c.l.bf16 %v30
  %v43 = vunpack.c.l.bf16 %v31
  %v44 = vunpack.c.l.bf16 %v32
  %v45 = vunpack.c.l.bf16 %v33
  %v46 = vunpack.c.l.bf16 %v34
  %v47 = vld [vmem:[%s0] sm:$0x1]
  %v49 = vlaneseq
  %v50 = vshrl.u32 %v49, 7
  %v51 = vsub.s32 0, %v50
  %v52 = vrot.slane %v47, %v51
  %v54 = vmul.f32 %v35, %v52
  %v55 = vmul.f32 %v36, %v52
  %v56 = vmul.f32 %v37, %v52
  %v57 = vmul.f32 %v38, %v52
  %v58 = vmul.f32 %v39, %v52
  %v59 = vmul.f32 %v40, %v52
  %v60 = vmul.f32 %v41, %v52
  %v61 = vmul.f32 %v42, %v52
  %v62 = vmul.f32 %v43, %v52
  %v63 = vmul.f32 %v44, %v52
  %v64 = vmul.f32 %v45, %v52
  %v65 = vmul.f32 %v46, %v52
  %v66 = vld [vmem:[%s1] sm:$0x1]
  %v68 = vlaneseq
  %v69 = vshrl.u32 %v68, 7
  %v70 = vsub.s32 0, %v69
  %v71 = vrot.slane %v66, %v70
  %v73 = vadd.f32 %v54, %v71
  %v74 = vadd.f32 %v55, %v71
  %v75 = vadd.f32 %v56, %v71
  %v76 = vadd.f32 %v57, %v71
  %v77 = vadd.f32 %v58, %v71
  %v78 = vadd.f32 %v59, %v71
  %v79 = vadd.f32 %v60, %v71
  %v80 = vadd.f32 %v61, %v71
  %v81 = vadd.f32 %v62, %v71
  %v82 = vadd.f32 %v63, %v71
  %v83 = vadd.f32 %v64, %v71
  %v84 = vadd.f32 %v65, %v71
  %v85 = vmax.f32 %v73, 0.0
  %v86 = vmax.f32 %v74, 0.0
  %v87 = vmax.f32 %v75, 0.0
  %v88 = vmax.f32 %v76, 0.0
  %v89 = vmax.f32 %v77, 0.0
  %v90 = vmax.f32 %v78, 0.0
  %v91 = vmax.f32 %v79, 0.0
  %v92 = vmax.f32 %v80, 0.0
  %v93 = vmax.f32 %v81, 0.0
  %v94 = vmax.f32 %v82, 0.0
  %v95 = vmax.f32 %v83, 0.0
  %v96 = vmax.f32 %v84, 0.0
  %v97 = vpack.c.bf16 %v86, %v85
  %v98 = vpack.c.bf16 %v88, %v87
  %v99 = vpack.c.bf16 %v90, %v89
  %v100 = vpack.c.bf16 %v92, %v91
  %v101 = vpack.c.bf16 %v94, %v93
  %v102 = vpack.c.bf16 %v96, %v95
  %v103 = vld [vmem:[%s2] sm:$0xff]
  %v104 = vld [vmem:[%s2 + $0x8] sm:$0xff]
  %v105 = vld [vmem:[%s2 + $0x10] sm:$0xff]
  %v106 = vld [vmem:[%s2 + $0x18] sm:$0xff]
  %v107 = vld [vmem:[%s2 + $0x20] sm:$0xff]
  %v108 = vld [vmem:[%s2 + $0x28] sm:$0xff]
  %v109 = vld [vmem:[%s2 + $0x30] sm:$0xff]
  %v110 = vld [vmem:[%s2 + $0x38] sm:$0xff]
  %v111 = vld [vmem:[%s2 + $0x40] sm:$0xff]
  %v112 = vld [vmem:[%s2 + $0x48] sm:$0xff]
  %v113 = vld [vmem:[%s2 + $0x50] sm:$0xff]
  %v114 = vld [vmem:[%s2 + $0x58] sm:$0xff]
  %v115 = vld [vmem:[%s2 + $0x60] sm:$0xff]
  %v116 = vld [vmem:[%s2 + $0x68] sm:$0xff]
  %v117 = vld [vmem:[%s2 + $0x70] sm:$0xff]
  %v118 = vld [vmem:[%s2 + $0x78] sm:$0xff]
  %v119 = vld [vmem:[%s3] sm:$0x3]
  %v121 = vlaneseq
  %v122 = vshrl.u32 %v121, 7
  %v123 = vsub.s32 0, %v122
  %v124 = vrot.slane %v119, %v123
  %v125 = vlaneseq
  %v126 = vshrl.u32 %v125, 7
  %v127 = vsub.s32 1, %v126
  %v128 = vrot.slane %v119, %v127
  %v147 = vunpack.c.l.b16 %v103
  %v148 = vunpack.c.h.b16 %v103
  %v149 = vunpack.c.l.b16 %v104
  %v150 = vunpack.c.h.b16 %v104
  %v151 = vunpack.c.l.b16 %v105
  %v152 = vunpack.c.h.b16 %v105
  %v153 = vunpack.c.l.b16 %v106
  %v154 = vunpack.c.h.b16 %v106
  %v155 = vunpack.c.l.b16 %v107
  %v156 = vunpack.c.h.b16 %v107
  %v157 = vunpack.c.l.b16 %v108
  %v158 = vunpack.c.h.b16 %v108
  %v159 = vunpack.c.l.b16 %v109
  %v160 = vunpack.c.h.b16 %v109
  %v161 = vunpack.c.l.b16 %v110
  %v162 = vunpack.c.h.b16 %v110
  %v163 = vunpack.c.l.b16 %v111
  %v164 = vunpack.c.h.b16 %v111
  %v165 = vunpack.c.l.b16 %v112
  %v166 = vunpack.c.h.b16 %v112
  %v167 = vunpack.c.l.b16 %v113
  %v168 = vunpack.c.h.b16 %v113
  %v169 = vunpack.c.l.b16 %v114
  %v170 = vunpack.c.h.b16 %v114
  %v171 = vunpack.c.l.b16 %v115
  %v172 = vunpack.c.h.b16 %v115
  %v173 = vunpack.c.l.b16 %v116
  %v174 = vunpack.c.h.b16 %v116
  %v175 = vunpack.c.l.b16 %v117
  %v176 = vunpack.c.h.b16 %v117
  %v177 = vunpack.c.l.b16 %v118
  %v178 = vunpack.c.h.b16 %v118
  %v179 = vpack.c.b16 %v149, %v147
  %v180 = vpack.c.b16 %v150, %v148
  %v181 = vpack.c.b16 %v153, %v151
  %v182 = vpack.c.b16 %v154, %v152
  %v183 = vpack.c.b16 %v157, %v155
  %v184 = vpack.c.b16 %v158, %v156
  %v185 = vpack.c.b16 %v161, %v159
  %v186 = vpack.c.b16 %v162, %v160
  %v187 = vpack.c.b16 %v165, %v163
  %v188 = vpack.c.b16 %v166, %v164
  %v189 = vpack.c.b16 %v169, %v167
  %v190 = vpack.c.b16 %v170, %v168
  %v191 = vpack.c.b16 %v173, %v171
  %v192 = vpack.c.b16 %v174, %v172
  %v193 = vpack.c.b16 %v177, %v175
  %v194 = vpack.c.b16 %v178, %v176
  %211 = vmatprep.subr.bf16.mxu0 %v194
  %212 = vmatpush1.bf16.msra.mxu0 %v193
  %213 = vmatprep.subr.bf16.mxu0 %v192
  %214 = vmatpush1.bf16.msra.mxu0 %v191
  %215 = vmatprep.subr.bf16.mxu0 %v190
  %216 = vmatpush1.bf16.msra.mxu0 %v189
  %217 = vmatprep.subr.bf16.mxu0 %v188
  %218 = vmatpush1.bf16.msra.mxu0 %v187
  %219 = vmatprep.subr.bf16.mxu0 %v186
  %220 = vmatpush1.bf16.msra.mxu0 %v185
  %221 = vmatprep.subr.bf16.mxu0 %v184
  %222 = vmatpush1.bf16.msra.mxu0 %v183
  %223 = vmatprep.subr.bf16.mxu0 %v182
  %224 = vmatpush1.bf16.msra.mxu0 %v181
  %225 = vmatprep.subr.bf16.mxu0 %v180
  %226 = vmatpush1.bf16.msra.mxu0 %v179
  %227 = vmatprep.subr.bf16.mxu0 0
  %228 = vmatpush2.bf16.msra.mxu0 0
  %229 = vmatprep.subr.bf16.mxu0 0
  %230 = vmatpush2.bf16.msra.mxu0 0
  %231 = vmatprep.subr.bf16.mxu0 0
  %232 = vmatpush2.bf16.msra.mxu0 0
  %233 = vmatprep.subr.bf16.mxu0 0
  %234 = vmatpush2.bf16.msra.mxu0 0
  %235 = vmatprep.subr.bf16.mxu0 0
  %236 = vmatpush2.bf16.msra.mxu0 0
  %237 = vmatprep.subr.bf16.mxu0 0
  %238 = vmatpush2.bf16.msra.mxu0 0
  %239 = vmatprep.subr.bf16.mxu0 0
  %240 = vmatpush2.bf16.msra.mxu0 0
  %241 = vmatprep.subr.bf16.mxu0 0
  %242 = vmatpush2.bf16.msra.mxu0 0
  %243 = vmatprep.mubr.bf16.mxu0 0
  %244 = vmatmul.mubr.bf16.gmra.mxu0 %v97
  %v245 = vpop.f32.mrf.mxu0
  %v246 = vadd.f32 %v124, %v245
  %v247 = vpop.f32.mrf.mxu0
  %v248 = vadd.f32 %v128, %v247
  %v249 = vpop.f32.mrf.mxu0
  %v250 = vadd.f32 %v124, %v249
  %v251 = vpop.f32.mrf.mxu0
  %v252 = vadd.f32 %v128, %v251
  %253 = vmatprep.mubr.bf16.mxu0 0
  %254 = vmatmul.mubr.bf16.gmra.mxu0 %v98
  %v255 = vpop.f32.mrf.mxu0
  %v256 = vadd.f32 %v124, %v255
  %v257 = vpop.f32.mrf.mxu0
  %v258 = vadd.f32 %v128, %v257
  %v259 = vpop.f32.mrf.mxu0
  %v260 = vadd.f32 %v124, %v259
  %v261 = vpop.f32.mrf.mxu0
  %v262 = vadd.f32 %v128, %v261
  %263 = vmatprep.mubr.bf16.mxu0 0
  %264 = vmatmul.mubr.bf16.gmra.mxu0 %v99
  %v265 = vpop.f32.mrf.mxu0
  %v266 = vadd.f32 %v124, %v265
  %v267 = vpop.f32.mrf.mxu0
  %v268 = vadd.f32 %v128, %v267
  %v269 = vpop.f32.mrf.mxu0
  %v270 = vadd.f32 %v124, %v269
  %v271 = vpop.f32.mrf.mxu0
  %v272 = vadd.f32 %v128, %v271
  %273 = vmatprep.mubr.bf16.mxu0 0
  %274 = vmatmul.mubr.bf16.gmra.mxu0 %v100
  %v275 = vpop.f32.mrf.mxu0
  %v276 = vadd.f32 %v124, %v275
  %v277 = vpop.f32.mrf.mxu0
  %v278 = vadd.f32 %v128, %v277
  %v279 = vpop.f32.mrf.mxu0
  %v280 = vadd.f32 %v124, %v279
  %v281 = vpop.f32.mrf.mxu0
  %v282 = vadd.f32 %v128, %v281
  %283 = vmatprep.mubr.bf16.mxu0 0
  %284 = vmatmul.mubr.bf16.gmra.mxu0 %v101
  %v285 = vpop.f32.mrf.mxu0
  %v286 = vadd.f32 %v124, %v285
  %v287 = vpop.f32.mrf.mxu0
  %v288 = vadd.f32 %v128, %v287
  %v289 = vpop.f32.mrf.mxu0
  %v290 = vadd.f32 %v124, %v289
  %v291 = vpop.f32.mrf.mxu0
  %v292 = vadd.f32 %v128, %v291
  %293 = vmatprep.mubr.bf16.mxu0 0
  %294 = vmatmul.mubr.bf16.gmra.mxu0 %v102
  %v295 = vpop.f32.mrf.mxu0
  %v296 = vadd.f32 %v124, %v295
  %v297 = vpop.f32.mrf.mxu0
  %v298 = vadd.f32 %v128, %v297
  %v299 = vpop.f32.mrf.mxu0
  %v300 = vadd.f32 %v124, %v299
  %v301 = vpop.f32.mrf.mxu0
  %v302 = vadd.f32 %v128, %v301
  %303 = vdwg.mxu0
  %s304 = smul.u32 0, 96
  %v305 = vlaneseq
  %v306 = vshrl.u32 %v305, 7
  %v307 = vadd.s32 %v306, 8
  %v308 = vadd.s32 %v306, 16
  %v309 = vadd.s32 %v306, 24
  %v310 = vadd.s32 %v306, 32
  %v311 = vadd.s32 %v306, 40
  %v312 = vadd.s32 %v306, 48
  %v313 = vadd.s32 %v306, 56
  %v314 = vadd.s32 %v306, 64
  %v315 = vadd.s32 %v306, 72
  %v316 = vadd.s32 %v306, 80
  %v317 = vadd.s32 %v306, 88
  %v318 = vstv %s304
  %v319 = vadd.s32 %v318, %v306
  %v320 = vadd.s32 %v318, %v307
  %v321 = vadd.s32 %v318, %v308
  %v322 = vadd.s32 %v318, %v309
  %v323 = vadd.s32 %v318, %v310
  %v324 = vadd.s32 %v318, %v311
  %v325 = vadd.s32 %v318, %v312
  %v326 = vadd.s32 %v318, %v313
  %v327 = vadd.s32 %v318, %v314
  %v328 = vadd.s32 %v318, %v315
  %v329 = vadd.s32 %v318, %v316
  %v330 = vadd.s32 %v318, %v317
  %vm331 = vcmp.lt.s32.totalorder %v319, 95
  %vm332 = vcmp.lt.s32.totalorder %v320, 95
  %vm333 = vcmp.lt.s32.totalorder %v321, 95
  %vm334 = vcmp.lt.s32.totalorder %v322, 95
  %vm335 = vcmp.lt.s32.totalorder %v323, 95
  %vm336 = vcmp.lt.s32.totalorder %v324, 95
  %vm337 = vcmp.lt.s32.totalorder %v325, 95
  %vm338 = vcmp.lt.s32.totalorder %v326, 95
  %vm339 = vcmp.lt.s32.totalorder %v327, 95
  %vm340 = vcmp.lt.s32.totalorder %v328, 95
  %vm341 = vcmp.lt.s32.totalorder %v329, 95
  %vm342 = vcmp.lt.s32.totalorder %v330, 95
  %v343 = vsel %vm331, 1, 0
  %v344 = vsel %vm332, 1, 0
  %v345 = vsel %vm333, 1, 0
  %v346 = vsel %vm334, 1, 0
  %v347 = vsel %vm335, 1, 0
  %v348 = vsel %vm336, 1, 0
  %v349 = vsel %vm337, 1, 0
  %v350 = vsel %vm338, 1, 0
  %v351 = vsel %vm339, 1, 0
  %v352 = vsel %vm340, 1, 0
  %v353 = vsel %vm341, 1, 0
  %v354 = vsel %vm342, 1, 0
  %v355 = vcvt.s32.f32 %v343
  %v356 = vcvt.s32.f32 %v344
  %v357 = vcvt.s32.f32 %v345
  %v358 = vcvt.s32.f32 %v346
  %v359 = vcvt.s32.f32 %v347
  %v360 = vcvt.s32.f32 %v348
  %v361 = vcvt.s32.f32 %v349
  %v362 = vcvt.s32.f32 %v350
  %v363 = vcvt.s32.f32 %v351
  %v364 = vcvt.s32.f32 %v352
  %v365 = vcvt.s32.f32 %v353
  %v366 = vcvt.s32.f32 %v354
  %v367 = vmul.f32 %v246, %v355
  %v368 = vmul.f32 %v248, %v355
  %v369 = vmul.f32 %v250, %v356
  %v370 = vmul.f32 %v252, %v356
  %v371 = vmul.f32 %v256, %v357
  %v372 = vmul.f32 %v258, %v357
  %v373 = vmul.f32 %v260, %v358
  %v374 = vmul.f32 %v262, %v358
  %v375 = vmul.f32 %v266, %v359
  %v376 = vmul.f32 %v268, %v359
  %v377 = vmul.f32 %v270, %v360
  %v378 = vmul.f32 %v272, %v360
  %v379 = vmul.f32 %v276, %v361
  %v380 = vmul.f32 %v278, %v361
  %v381 = vmul.f32 %v280, %v362
  %v382 = vmul.f32 %v282, %v362
  %v383 = vmul.f32 %v286, %v363
  %v384 = vmul.f32 %v288, %v363
  %v385 = vmul.f32 %v290, %v364
  %v386 = vmul.f32 %v292, %v364
  %v387 = vmul.f32 %v296, %v365
  %v388 = vmul.f32 %v298, %v365
  %v389 = vmul.f32 %v300, %v366
  %v390 = vmul.f32 %v302, %v366
  %v391 = vadd.f32 %v367, %v369
  %v392 = vadd.f32 %v391, %v371
  %v393 = vadd.f32 %v392, %v373
  %v394 = vadd.f32 %v393, %v375
  %v395 = vadd.f32 %v394, %v377
  %v396 = vadd.f32 %v395, %v379
  %v397 = vadd.f32 %v396, %v381
  %v398 = vadd.f32 %v397, %v383
  %v399 = vadd.f32 %v398, %v385
  %v400 = vadd.f32 %v399, %v387
  %v401 = vadd.f32 %v400, %v389
  %v402 = vrot.slane %v401, 4
  %v403 = vadd.f32 %v401, %v402
  %v404 = vrot.slane %v403, 2
  %v405 = vadd.f32 %v403, %v404
  %v406 = vrot.slane %v405, 1
  %v407 = vadd.f32 %v405, %v406
  %v408 = vadd.f32 %v368, %v370
  %v409 = vadd.f32 %v408, %v372
  %v410 = vadd.f32 %v409, %v374
  %v411 = vadd.f32 %v410, %v376
  %v412 = vadd.f32 %v411, %v378
  %v413 = vadd.f32 %v412, %v380
  %v414 = vadd.f32 %v413, %v382
  %v415 = vadd.f32 %v414, %v384
  %v416 = vadd.f32 %v415, %v386
  %v417 = vadd.f32 %v416, %v388
  %v418 = vadd.f32 %v417, %v390
  %v419 = vrot.slane %v418, 4
  %v420 = vadd.f32 %v418, %v419
  %v421 = vrot.slane %v420, 2
  %v422 = vadd.f32 %v420, %v421
  %v423 = vrot.slane %v422, 1
  %v424 = vadd.f32 %v422, %v423
  %v425 = vmul.f32 %v367, %v367
  %v426 = vmul.f32 %v368, %v368
  %v427 = vmul.f32 %v369, %v369
  %v428 = vmul.f32 %v370, %v370
  %v429 = vmul.f32 %v371, %v371
  %v430 = vmul.f32 %v372, %v372
  %v431 = vmul.f32 %v373, %v373
  %v432 = vmul.f32 %v374, %v374
  %v433 = vmul.f32 %v375, %v375
  %v434 = vmul.f32 %v376, %v376
  %v435 = vmul.f32 %v377, %v377
  %v436 = vmul.f32 %v378, %v378
  %v437 = vmul.f32 %v379, %v379
  %v438 = vmul.f32 %v380, %v380
  %v439 = vmul.f32 %v381, %v381
  %v440 = vmul.f32 %v382, %v382
  %v441 = vmul.f32 %v383, %v383
  %v442 = vmul.f32 %v384, %v384
  %v443 = vmul.f32 %v385, %v385
  %v444 = vmul.f32 %v386, %v386
  %v445 = vmul.f32 %v387, %v387
  %v446 = vmul.f32 %v388, %v388
  %v447 = vmul.f32 %v389, %v389
  %v448 = vmul.f32 %v390, %v390
  %v449 = vadd.f32 %v425, %v427
  %v450 = vadd.f32 %v449, %v429
  %v451 = vadd.f32 %v450, %v431
  %v452 = vadd.f32 %v451, %v433
  %v453 = vadd.f32 %v452, %v435
  %v454 = vadd.f32 %v453, %v437
  %v455 = vadd.f32 %v454, %v439
  %v456 = vadd.f32 %v455, %v441
  %v457 = vadd.f32 %v456, %v443
  %v458 = vadd.f32 %v457, %v445
  %v459 = vadd.f32 %v458, %v447
  %v460 = vrot.slane %v459, 4
  %v461 = vadd.f32 %v459, %v460
  %v462 = vrot.slane %v461, 2
  %v463 = vadd.f32 %v461, %v462
  %v464 = vrot.slane %v463, 1
  %v465 = vadd.f32 %v463, %v464
  %v466 = vadd.f32 %v426, %v428
  %v467 = vadd.f32 %v466, %v430
  %v468 = vadd.f32 %v467, %v432
  %v469 = vadd.f32 %v468, %v434
  %v470 = vadd.f32 %v469, %v436
  %v471 = vadd.f32 %v470, %v438
  %v472 = vadd.f32 %v471, %v440
  %v473 = vadd.f32 %v472, %v442
  %v474 = vadd.f32 %v473, %v444
  %v475 = vadd.f32 %v474, %v446
  %v476 = vadd.f32 %v475, %v448
  %v477 = vrot.slane %v476, 4
  %v478 = vadd.f32 %v476, %v477
  %v479 = vrot.slane %v478, 2
  %v480 = vadd.f32 %v478, %v479
  %v481 = vrot.slane %v480, 1
  %v482 = vadd.f32 %v480, %v481
  %vm483 = vcmask 1040384
  %v484 = vsel %vm483, %v407, %v465
  %v485 = vsel %vm483, %v424, %v482
  %v488 = vcombine.low %v484, %v485
  %v490 = vunpack.c.l.s4 1983009808
  %v491 = vunpack.c.0.s8 %v490
  %v492 = vlaneseq
  %v493 = vshrl.u32 %v492, 7
  %v494 = vsub.s32 %v491, %v493
  %v495 = vrot.slane %v488, %v494
  %497 = vst [vmem:[%s6] sm:$0xf] %v495
  %v498 = vpack.c.bf16 %v369, %v367
  %v499 = vpack.c.bf16 %v370, %v368
  %v500 = vpack.c.bf16 %v373, %v371
  %v501 = vpack.c.bf16 %v374, %v372
  %v502 = vpack.c.bf16 %v377, %v375
  %v503 = vpack.c.bf16 %v378, %v376
  %v504 = vpack.c.bf16 %v381, %v379
  %v505 = vpack.c.bf16 %v382, %v380
  %v506 = vpack.c.bf16 %v385, %v383
  %v507 = vpack.c.bf16 %v386, %v384
  %v508 = vpack.c.bf16 %v389, %v387
  %v509 = vpack.c.bf16 %v390, %v388
  %v522 = vunpack.c.l.b16 %v498
  %v523 = vunpack.c.l.b16 %v499
  %v524 = vunpack.c.h.b16 %v498
  %v525 = vunpack.c.h.b16 %v499
  %v526 = vunpack.c.l.b16 %v500
  %v527 = vunpack.c.l.b16 %v501
  %v528 = vunpack.c.h.b16 %v500
  %v529 = vunpack.c.h.b16 %v501
  %v530 = vunpack.c.l.b16 %v502
  %v531 = vunpack.c.l.b16 %v503
  %v532 = vunpack.c.h.b16 %v502
  %v533 = vunpack.c.h.b16 %v503
  %v534 = vunpack.c.l.b16 %v504
  %v535 = vunpack.c.l.b16 %v505
  %v536 = vunpack.c.h.b16 %v504
  %v537 = vunpack.c.h.b16 %v505
  %v538 = vunpack.c.l.b16 %v506
  %v539 = vunpack.c.l.b16 %v507
  %v540 = vunpack.c.h.b16 %v506
  %v541 = vunpack.c.h.b16 %v507
  %v542 = vunpack.c.l.b16 %v508
  %v543 = vunpack.c.l.b16 %v509
  %v544 = vunpack.c.h.b16 %v508
  %v545 = vunpack.c.h.b16 %v509
  %v546 = vpack.c.b16 %v523, %v522
  %v547 = vpack.c.b16 %v525, %v524
  %v548 = vpack.c.b16 %v527, %v526
  %v549 = vpack.c.b16 %v529, %v528
  %v550 = vpack.c.b16 %v531, %v530
  %v551 = vpack.c.b16 %v533, %v532
  %v552 = vpack.c.b16 %v535, %v534
  %v553 = vpack.c.b16 %v537, %v536
  %v554 = vpack.c.b16 %v539, %v538
  %v555 = vpack.c.b16 %v541, %v540
  %v556 = vpack.c.b16 %v543, %v542
  %v557 = vpack.c.b16 %v545, %v544
  %570 = vst [vmem:[%s5] sm:$0xff] %v546
  %571 = vst [vmem:[%s5 + $0x8] sm:$0xff] %v547
  %572 = vst [vmem:[%s5 + $0x10] sm:$0xff] %v548
  %573 = vst [vmem:[%s5 + $0x18] sm:$0xff] %v549
  %574 = vst [vmem:[%s5 + $0x20] sm:$0xff] %v550
  %575 = vst [vmem:[%s5 + $0x28] sm:$0xff] %v551
  %576 = vst [vmem:[%s5 + $0x30] sm:$0xff] %v552
  %577 = vst [vmem:[%s5 + $0x38] sm:$0xff] %v553
  %578 = vst [vmem:[%s5 + $0x40] sm:$0xff] %v554
  %579 = vst [vmem:[%s5 + $0x48] sm:$0xff] %v555
  %580 = vst [vmem:[%s5 + $0x50] sm:$0xff] %v556
  %581 = vst [vmem:[%s5 + $0x58] sm:$0xff] %v557
  // Predicated region
  $region22: #{_ppmodel_forward.4} parent=0 // pred_check
    _
  $region23: #{_ppmodel_forward.4} parent=0 // pred_check_branch
    %583 = sbr.rel (0) target = $region25
  $region24: #{_ppmodel_forward.4} parent=0 // pred_region
    _
  $region25: #{_ppmodel_forward.4} parent=0 // pred_fallthru
    _
  // Predicated region
  $region26: #{_ppmodel_forward.4} parent=0 // pred_check
    _
  $region27: #{_ppmodel_forward.4} parent=0 // pred_check_branch
    %585 = sbr.rel (0) target = $region29
  $region28: #{_ppmodel_forward.4} parent=0 // pred_region
    _
  $region29: #{_ppmodel_forward.4} parent=0 // pred_fallthru
    _
  // Predicated region
  $region30: #{_ppmodel_forward.4} parent=0 // pred_check
    _
  $region31: #{_ppmodel_forward.4} parent=0 // pred_check_branch
    %587 = sbr.rel (0) target = $region33
  $region32: #{_ppmodel_forward.4} parent=0 // pred_region
    _
  $region33: #{_ppmodel_forward.4} parent=0 // pred_fallthru
    _
  // Predicated region
  $region34: #{_ppmodel_forward.4} parent=0 // pred_check
    _
  $region35: #{_ppmodel_forward.4} parent=0 // pred_check_branch
    %589 = sbr.rel (0) target = $region37
  $region36: #{_ppmodel_forward.4} parent=0 // pred_region
    _
  $region37: #{_ppmodel_forward.4} parent=0 // pred_fallthru
    _

</llo_original>
